<compile_context>
chip_gen: v6e
topology: v6e:2x2x1
jax: 0.10.0
libtpu: 0.0.40
codegen_flags: <defaults>
</compile_context>

<pallas_src>
import functools

import jax
import jax.numpy as jnp
from jax.experimental import pallas as pl
from jax.experimental.pallas import tpu as pltpu


# ----------------------------------------------------------------------------
# Fused kernel: input projections + both LSTM directions + masked temporal
# max-pool + MLP classifier.  Single invocation, everything VMEM-resident.
# ----------------------------------------------------------------------------
def _fused_bilstm_kernel(x_ref, len_ref, wih_ref, bias_ref,
                         whh_f_ref, whh_b_ref,
                         w1t_ref, b1_ref, w2t_ref, b2_ref,
                         out_ref, gx_scr, *, T, B, H):
    neg_big = jnp.float32(-100000000.0)

    x = x_ref[...]                      # (T*B, E), time-major rows
    lens = len_ref[...]                 # (B, 1) int32

    # ---- hoisted input projection, both directions at once (lane-dense 8H) --
    # gates_x = X @ [W_ih_f^T | W_ih_b^T] + [b_f | b_b]   -> (T*B, 8H)
    gx_scr[...] = (jnp.dot(x, wih_ref[...], preferred_element_type=jnp.float32)
                   + bias_ref[...])

    def run_direction(whh_t, lane_off, reverse):
        """Runs one LSTM direction; returns the running masked max (B, H)."""

        def step(i, carry):
            h, c, pooled = carry
            t = (T - 1 - i) if reverse else i            # static trace-time branch
            row = pl.multiple_of(t * B, B)
            gx = gx_scr[pl.ds(row, B), lane_off:lane_off + 4 * H]   # (B, 4H)
            g = gx + jnp.dot(h, whh_t, preferred_element_type=jnp.float32)

            # Full-width transcendentals on the (B, 4H=128) gates vreg (EUP),
            # then cheap static lane slices per gate (PyTorch order i, f, g, o).
            sg = jax.nn.sigmoid(g)
            th = jnp.tanh(g)
            i_g = sg[:, 0 * H:1 * H]
            f_g = sg[:, 1 * H:2 * H]
            g_g = th[:, 2 * H:3 * H]
            o_g = sg[:, 3 * H:4 * H]

            c_new = f_g * c + i_g * g_g
            h_new = o_g * jnp.tanh(c_new)

            # packed-sequence semantics: advance state only while t < length.
            m = jnp.broadcast_to(lens > t, (B, H))        # hoisted broadcast
            c = jnp.where(m, c_new, c)
            h = jnp.where(m, h_new, h)

            # pad_packed (exact zeros) + `where(x==0,-1e8,x)` + max-over-time,
            # fused into a running max (never materialized to HBM).
            contrib = jnp.where(m, jnp.where(h_new == 0.0, neg_big, h_new),
                                neg_big)
            pooled = jnp.maximum(pooled, contrib)
            return h, c, pooled

        init = (jnp.zeros((B, H), jnp.float32),
                jnp.zeros((B, H), jnp.float32),
                jnp.full((B, H), neg_big, jnp.float32))
        _, _, pooled = jax.lax.fori_loop(0, T, step, init, unroll=True)
        return pooled

    pooled_f = run_direction(whh_f_ref[...], 0, reverse=False)
    pooled_b = run_direction(whh_b_ref[...], 4 * H, reverse=True)

    # ---- classifier: Linear(2H,2H) + ReLU + Linear(2H, C-1) -----------------
    # Concat of [pooled_f, pooled_b] avoided by splitting W1's input rows.
    z = (jnp.dot(pooled_f, w1t_ref[0:H, :], preferred_element_type=jnp.float32)
         + jnp.dot(pooled_b, w1t_ref[H:2 * H, :],
                   preferred_element_type=jnp.float32)
         + b1_ref[...])
    z = jnp.maximum(z, 0.0)
    out_ref[...] = (jnp.dot(z, w2t_ref[...], preferred_element_type=jnp.float32)
                    + b2_ref[...])


# ----------------------------------------------------------------------------
# Full model forward (wrapper: embedding gather + weight packing in XLA).
# ----------------------------------------------------------------------------
def bilstm_reg_forward(tokens, lengths, params):
    # Embedding lookup, emitted directly time-major (embedded_dropout is
    # identity at eval time).  (T,B,E) -> (T*B,E) is a free row-major reshape.
    x = jnp.take(params["embedding"], tokens.T, axis=0).astype(jnp.float32)
    T, B, E = x.shape
    x2 = x.reshape(T * B, E)
    lens = lengths.reshape(B, 1).astype(jnp.int32)

    H = params["w_hh_f"].shape[1]
    f32 = jnp.float32

    # Pack both directions' input-projection weights/biases side by side
    # (gate order per direction: i, f, g, o).  WeightDrop is identity at eval.
    wih_cat = jnp.concatenate(
        [jnp.asarray(params["w_ih_f"], f32).T,
         jnp.asarray(params["w_ih_b"], f32).T], axis=1)           # (E, 8H)
    bias_cat = jnp.concatenate(
        [(params["b_ih_f"] + params["b_hh_f"]).astype(f32),
         (params["b_ih_b"] + params["b_hh_b"]).astype(f32)]).reshape(1, 8 * H)
    whh_f_t = jnp.asarray(params["w_hh_f"], f32).T                # (H, 4H)
    whh_b_t = jnp.asarray(params["w_hh_b"], f32).T                # (H, 4H)

    w1t = jnp.asarray(params["w1"], f32).T                        # (2H, 2H)
    b1 = jnp.asarray(params["b1"], f32).reshape(1, -1)
    w2t = jnp.asarray(params["w2"], f32).T                        # (2H, C-1)
    b2 = jnp.asarray(params["b2"], f32).reshape(1, -1)
    n_out = w2t.shape[1]

    kernel = functools.partial(_fused_bilstm_kernel, T=T, B=B, H=H)
    vmem = pl.BlockSpec(memory_space=pltpu.MemorySpace.VMEM)
    return pl.pallas_call(
        kernel,
        out_shape=jax.ShapeDtypeStruct((B, n_out), jnp.float32),
        in_specs=[vmem] * 10,
        out_specs=vmem,
        scratch_shapes=[pltpu.VMEM((T * B, 8 * H), jnp.float32)],
    )(x2, lens, wih_cat, bias_cat, whh_f_t, whh_b_t, w1t, b1, w2t, b2)


# ----------------------------------------------------------------------------
# Deterministic synthetic parameters / inputs.
# ----------------------------------------------------------------------------
def init_params(key, vocab, embed_dim, lstm_dim, n_classes):
    ks = jax.random.split(key, 12)
    u = lambda k, shape, s: jax.random.uniform(k, shape, jnp.float32, -s, s)
    std = 1.0 / jnp.sqrt(lstm_dim)
    return {
        "embedding": u(ks[0], (vocab, embed_dim), 0.1),
        # forward direction LSTM (PyTorch gate order i, f, g, o)
        "w_ih_f": u(ks[1], (4 * lstm_dim, embed_dim), std),
        "w_hh_f": u(ks[2], (4 * lstm_dim, lstm_dim), std),
        "b_ih_f": u(ks[3], (4 * lstm_dim,), std),
        "b_hh_f": u(ks[4], (4 * lstm_dim,), std),
        # backward direction LSTM
        "w_ih_b": u(ks[5], (4 * lstm_dim, embed_dim), std),
        "w_hh_b": u(ks[6], (4 * lstm_dim, lstm_dim), std),
        "b_ih_b": u(ks[7], (4 * lstm_dim,), std),
        "b_hh_b": u(ks[8], (4 * lstm_dim,), std),
        # classifier: Linear(2H, 2H) -> ReLU -> Linear(2H, C-1)
        "w1": u(ks[9], (2 * lstm_dim, 2 * lstm_dim), 0.1),
        "b1": u(ks[10], (2 * lstm_dim,), 0.1),
        "w2": u(ks[11], (n_classes - 1, 2 * lstm_dim), 0.1),
        "b2": jnp.zeros((n_classes - 1,), jnp.float32),
    }


if __name__ == "__main__":
    VOCAB, EMBED_DIM, LSTM_DIM, N_CLASSES = 50, 32, 32, 5
    B, T = 8, 8

    key = jax.random.PRNGKey(0)
    k_tok, k_par = jax.random.split(key)

    params = init_params(k_par, VOCAB, EMBED_DIM, LSTM_DIM, N_CLASSES)
    tokens = jax.random.randint(k_tok, (B, T), 0, VOCAB, dtype=jnp.int32)
    lengths = jnp.array([8, 5, 3, 8, 1, 6, 7, 2], dtype=jnp.int32)

    out = jax.jit(bilstm_reg_forward)(tokens, lengths, params)
    out = jax.block_until_ready(out)
    assert out.shape == (B, N_CLASSES - 1)
    assert bool(jnp.all(jnp.isfinite(out)))
    print("KERNEL_OK")
</pallas_src>

<mosaic_0001>
module attributes {stable_mosaic.version = 11 : i64} {
  func.func @_fused_bilstm_kernel(%arg0: memref<64x32xf32, #tpu.memory_space<vmem>>, %arg1: memref<8x1xi32, #tpu.memory_space<vmem>>, %arg2: memref<32x256xf32, #tpu.memory_space<vmem>>, %arg3: memref<1x256xf32, #tpu.memory_space<vmem>>, %arg4: memref<32x128xf32, #tpu.memory_space<vmem>>, %arg5: memref<32x128xf32, #tpu.memory_space<vmem>>, %arg6: memref<64x64xf32, #tpu.memory_space<vmem>>, %arg7: memref<1x64xf32, #tpu.memory_space<vmem>>, %arg8: memref<64x4xf32, #tpu.memory_space<vmem>>, %arg9: memref<1x4xf32, #tpu.memory_space<vmem>>, %arg10: memref<8x4xf32, #tpu.memory_space<vmem>>, %arg11: memref<64x256xf32, #tpu.memory_space<vmem>>) attributes {dimension_semantics = [], scalar_prefetch = 0 : i64, scratch_operands = 1 : i64, tpu.core_type = #tpu.core_type<tc>} {
    %c0 = arith.constant 0 : index
    %c0_0 = arith.constant 0 : index
    %0 = vector.load %arg0[%c0, %c0_0] : memref<64x32xf32, #tpu.memory_space<vmem>>, vector<64x32xf32>
    %c0_1 = arith.constant 0 : index
    %c0_2 = arith.constant 0 : index
    %1 = vector.load %arg1[%c0_1, %c0_2] : memref<8x1xi32, #tpu.memory_space<vmem>>, vector<8x1xi32>
    %c0_3 = arith.constant 0 : index
    %c0_4 = arith.constant 0 : index
    %2 = vector.load %arg2[%c0_3, %c0_4] : memref<32x256xf32, #tpu.memory_space<vmem>>, vector<32x256xf32>
    %cst = arith.constant dense<0.000000e+00> : vector<64x256xf32>
    %3 = tpu.matmul %0, %2, %cst {dimension_numbers = #tpu.dot_dimension_numbers<[1], [0], [0], [1], [0, 0, 1, 1], [], []>} : vector<64x32xf32>, vector<32x256xf32>, vector<64x256xf32> -> vector<64x256xf32>
    %c0_5 = arith.constant 0 : index
    %c0_6 = arith.constant 0 : index
    %4 = vector.load %arg3[%c0_5, %c0_6] : memref<1x256xf32, #tpu.memory_space<vmem>>, vector<1x256xf32>
    %5 = vector.broadcast %4 : vector<1x256xf32> to vector<64x256xf32>
    %6 = arith.addf %3, %5 : vector<64x256xf32>
    %c0_7 = arith.constant 0 : index
    %c0_8 = arith.constant 0 : index
    %7 = vector.load %arg11[%c0_7, %c0_8] : memref<64x256xf32, #tpu.memory_space<vmem>>, vector<64x256xf32>
    tpu.vector_store %arg11[%c0_7, %c0_8], %6 {strides = array<i32>} : memref<64x256xf32, #tpu.memory_space<vmem>>, vector<64x256xf32>,
    %c0_9 = arith.constant 0 : index
    %c0_10 = arith.constant 0 : index
    %8 = vector.load %arg4[%c0_9, %c0_10] : memref<32x128xf32, #tpu.memory_space<vmem>>, vector<32x128xf32>
    %cst_11 = arith.constant 0.000000e+00 : f32
    %9 = vector.broadcast %cst_11 : f32 to vector<8x32xf32>
    %cst_12 = arith.constant 0.000000e+00 : f32
    %10 = vector.broadcast %cst_12 : f32 to vector<8x32xf32>
    %cst_13 = arith.constant -1.000000e+08 : f32
    %11 = vector.broadcast %cst_13 : f32 to vector<8x32xf32>
    %cst_14 = arith.constant -1.000000e+08 : f32
    %c0_i32 = arith.constant 0 : i32
    %c8_i32 = arith.constant 8 : i32
    %12 = arith.muli %c0_i32, %c8_i32 : i32
    %13 = tpu.assume_multiple %12, 8 : i32
    %14 = arith.index_cast %13 : i32 to index
    %c0_15 = arith.constant 0 : index
    %15 = vector.load %arg11[%14, %c0_15] : memref<64x256xf32, #tpu.memory_space<vmem>>, vector<8x128xf32>
    %cst_16 = arith.constant dense<0.000000e+00> : vector<8x128xf32>
    %16 = tpu.matmul %9, %8, %cst_16 {dimension_numbers = #tpu.dot_dimension_numbers<[1], [0], [0], [1], [0, 0, 1, 1], [], []>} : vector<8x32xf32>, vector<32x128xf32>, vector<8x128xf32> -> vector<8x128xf32>
    %17 = arith.addf %15, %16 : vector<8x128xf32>
    %18 = arith.negf %17 : vector<8x128xf32>
    %19 = math.exp %18 : vector<8x128xf32>
    %cst_17 = arith.constant 1.000000e+00 : f32
    %20 = vector.broadcast %cst_17 : f32 to vector<8x128xf32>
    %21 = arith.addf %20, %19 : vector<8x128xf32>
    %22 = arith.divf %20, %21 : vector<8x128xf32>
    %23 = math.tanh %17 : vector<8x128xf32>
    %24 = vector.extract_strided_slice %22 {offsets = [0, 0], sizes = [8, 32], strides = [1, 1]} : vector<8x128xf32> to vector<8x32xf32>
    %25 = vector.extract_strided_slice %22 {offsets = [0, 32], sizes = [8, 32], strides = [1, 1]} : vector<8x128xf32> to vector<8x32xf32>
    %26 = vector.extract_strided_slice %23 {offsets = [0, 64], sizes = [8, 32], strides = [1, 1]} : vector<8x128xf32> to vector<8x32xf32>
    %27 = vector.extract_strided_slice %22 {offsets = [0, 96], sizes = [8, 32], strides = [1, 1]} : vector<8x128xf32> to vector<8x32xf32>
    %28 = arith.mulf %25, %10 : vector<8x32xf32>
    %29 = arith.mulf %24, %26 : vector<8x32xf32>
    %30 = arith.addf %28, %29 : vector<8x32xf32>
    %31 = math.tanh %30 : vector<8x32xf32>
    %32 = arith.mulf %27, %31 : vector<8x32xf32>
    %33 = vector.broadcast %c0_i32 : i32 to vector<8x1xi32>
    %34 = arith.cmpi sgt, %1, %33 : vector<8x1xi32>
    %35 = vector.shape_cast %34 : vector<8x1xi1> to vector<8x1xi1>
    %36 = vector.broadcast %35 : vector<8x1xi1> to vector<8x32xi1>
    %37 = arith.select %36, %30, %10 : vector<8x32xi1>, vector<8x32xf32>
    %38 = arith.select %36, %32, %9 : vector<8x32xi1>, vector<8x32xf32>
    %cst_18 = arith.constant 0.000000e+00 : f32
    %39 = vector.broadcast %cst_18 : f32 to vector<8x32xf32>
    %40 = arith.cmpf oeq, %32, %39 : vector<8x32xf32>
    %41 = vector.broadcast %cst_14 : f32 to vector<8x32xf32>
    %42 = arith.select %40, %41, %32 : vector<8x32xi1>, vector<8x32xf32>
    %43 = vector.broadcast %cst_14 : f32 to vector<8x32xf32>
    %44 = arith.select %36, %42, %43 : vector<8x32xi1>, vector<8x32xf32>
    %45 = arith.maximumf %11, %44 : vector<8x32xf32>
    %c1_i32 = arith.constant 1 : i32
    %c8_i32_19 = arith.constant 8 : i32
    %46 = arith.muli %c1_i32, %c8_i32_19 : i32
    %47 = tpu.assume_multiple %46, 8 : i32
    %48 = arith.index_cast %47 : i32 to index
    %c0_20 = arith.constant 0 : index
    %49 = vector.load %arg11[%48, %c0_20] : memref<64x256xf32, #tpu.memory_space<vmem>>, vector<8x128xf32>
    %cst_21 = arith.constant dense<0.000000e+00> : vector<8x128xf32>
    %50 = tpu.matmul %38, %8, %cst_21 {dimension_numbers = #tpu.dot_dimension_numbers<[1], [0], [0], [1], [0, 0, 1, 1], [], []>} : vector<8x32xf32>, vector<32x128xf32>, vector<8x128xf32> -> vector<8x128xf32>
    %51 = arith.addf %49, %50 : vector<8x128xf32>
    %52 = arith.negf %51 : vector<8x128xf32>
    %53 = math.exp %52 : vector<8x128xf32>
    %cst_22 = arith.constant 1.000000e+00 : f32
    %54 = vector.broadcast %cst_22 : f32 to vector<8x128xf32>
    %55 = arith.addf %54, %53 : vector<8x128xf32>
    %56 = arith.divf %54, %55 : vector<8x128xf32>
    %57 = math.tanh %51 : vector<8x128xf32>
    %58 = vector.extract_strided_slice %56 {offsets = [0, 0], sizes = [8, 32], strides = [1, 1]} : vector<8x128xf32> to vector<8x32xf32>
    %59 = vector.extract_strided_slice %56 {offsets = [0, 32], sizes = [8, 32], strides = [1, 1]} : vector<8x128xf32> to vector<8x32xf32>
    %60 = vector.extract_strided_slice %57 {offsets = [0, 64], sizes = [8, 32], strides = [1, 1]} : vector<8x128xf32> to vector<8x32xf32>
    %61 = vector.extract_strided_slice %56 {offsets = [0, 96], sizes = [8, 32], strides = [1, 1]} : vector<8x128xf32> to vector<8x32xf32>
    %62 = arith.mulf %59, %37 : vector<8x32xf32>
    %63 = arith.mulf %58, %60 : vector<8x32xf32>
    %64 = arith.addf %62, %63 : vector<8x32xf32>
    %65 = math.tanh %64 : vector<8x32xf32>
    %66 = arith.mulf %61, %65 : vector<8x32xf32>
    %67 = vector.broadcast %c1_i32 : i32 to vector<8x1xi32>
    %68 = arith.cmpi sgt, %1, %67 : vector<8x1xi32>
    %69 = vector.shape_cast %68 : vector<8x1xi1> to vector<8x1xi1>
    %70 = vector.broadcast %69 : vector<8x1xi1> to vector<8x32xi1>
    %71 = arith.select %70, %64, %37 : vector<8x32xi1>, vector<8x32xf32>
    %72 = arith.select %70, %66, %38 : vector<8x32xi1>, vector<8x32xf32>
    %cst_23 = arith.constant 0.000000e+00 : f32
    %73 = vector.broadcast %cst_23 : f32 to vector<8x32xf32>
    %74 = arith.cmpf oeq, %66, %73 : vector<8x32xf32>
    %75 = vector.broadcast %cst_14 : f32 to vector<8x32xf32>
    %76 = arith.select %74, %75, %66 : vector<8x32xi1>, vector<8x32xf32>
    %77 = vector.broadcast %cst_14 : f32 to vector<8x32xf32>
    %78 = arith.select %70, %76, %77 : vector<8x32xi1>, vector<8x32xf32>
    %79 = arith.maximumf %45, %78 : vector<8x32xf32>
    %c2_i32 = arith.constant 2 : i32
    %c8_i32_24 = arith.constant 8 : i32
    %80 = arith.muli %c2_i32, %c8_i32_24 : i32
    %81 = tpu.assume_multiple %80, 8 : i32
    %82 = arith.index_cast %81 : i32 to index
    %c0_25 = arith.constant 0 : index
    %83 = vector.load %arg11[%82, %c0_25] : memref<64x256xf32, #tpu.memory_space<vmem>>, vector<8x128xf32>
    %cst_26 = arith.constant dense<0.000000e+00> : vector<8x128xf32>
    %84 = tpu.matmul %72, %8, %cst_26 {dimension_numbers = #tpu.dot_dimension_numbers<[1], [0], [0], [1], [0, 0, 1, 1], [], []>} : vector<8x32xf32>, vector<32x128xf32>, vector<8x128xf32> -> vector<8x128xf32>
    %85 = arith.addf %83, %84 : vector<8x128xf32>
    %86 = arith.negf %85 : vector<8x128xf32>
    %87 = math.exp %86 : vector<8x128xf32>
    %cst_27 = arith.constant 1.000000e+00 : f32
    %88 = vector.broadcast %cst_27 : f32 to vector<8x128xf32>
    %89 = arith.addf %88, %87 : vector<8x128xf32>
    %90 = arith.divf %88, %89 : vector<8x128xf32>
    %91 = math.tanh %85 : vector<8x128xf32>
    %92 = vector.extract_strided_slice %90 {offsets = [0, 0], sizes = [8, 32], strides = [1, 1]} : vector<8x128xf32> to vector<8x32xf32>
    %93 = vector.extract_strided_slice %90 {offsets = [0, 32], sizes = [8, 32], strides = [1, 1]} : vector<8x128xf32> to vector<8x32xf32>
    %94 = vector.extract_strided_slice %91 {offsets = [0, 64], sizes = [8, 32], strides = [1, 1]} : vector<8x128xf32> to vector<8x32xf32>
    %95 = vector.extract_strided_slice %90 {offsets = [0, 96], sizes = [8, 32], strides = [1, 1]} : vector<8x128xf32> to vector<8x32xf32>
    %96 = arith.mulf %93, %71 : vector<8x32xf32>
    %97 = arith.mulf %92, %94 : vector<8x32xf32>
    %98 = arith.addf %96, %97 : vector<8x32xf32>
    %99 = math.tanh %98 : vector<8x32xf32>
    %100 = arith.mulf %95, %99 : vector<8x32xf32>
    %101 = vector.broadcast %c2_i32 : i32 to vector<8x1xi32>
    %102 = arith.cmpi sgt, %1, %101 : vector<8x1xi32>
    %103 = vector.shape_cast %102 : vector<8x1xi1> to vector<8x1xi1>
    %104 = vector.broadcast %103 : vector<8x1xi1> to vector<8x32xi1>
    %105 = arith.select %104, %98, %71 : vector<8x32xi1>, vector<8x32xf32>
    %106 = arith.select %104, %100, %72 : vector<8x32xi1>, vector<8x32xf32>
    %cst_28 = arith.constant 0.000000e+00 : f32
    %107 = vector.broadcast %cst_28 : f32 to vector<8x32xf32>
    %108 = arith.cmpf oeq, %100, %107 : vector<8x32xf32>
    %109 = vector.broadcast %cst_14 : f32 to vector<8x32xf32>
    %110 = arith.select %108, %109, %100 : vector<8x32xi1>, vector<8x32xf32>
    %111 = vector.broadcast %cst_14 : f32 to vector<8x32xf32>
    %112 = arith.select %104, %110, %111 : vector<8x32xi1>, vector<8x32xf32>
    %113 = arith.maximumf %79, %112 : vector<8x32xf32>
    %c3_i32 = arith.constant 3 : i32
    %c8_i32_29 = arith.constant 8 : i32
    %114 = arith.muli %c3_i32, %c8_i32_29 : i32
    %115 = tpu.assume_multiple %114, 8 : i32
    %116 = arith.index_cast %115 : i32 to index
    %c0_30 = arith.constant 0 : index
    %117 = vector.load %arg11[%116, %c0_30] : memref<64x256xf32, #tpu.memory_space<vmem>>, vector<8x128xf32>
    %cst_31 = arith.constant dense<0.000000e+00> : vector<8x128xf32>
    %118 = tpu.matmul %106, %8, %cst_31 {dimension_numbers = #tpu.dot_dimension_numbers<[1], [0], [0], [1], [0, 0, 1, 1], [], []>} : vector<8x32xf32>, vector<32x128xf32>, vector<8x128xf32> -> vector<8x128xf32>
    %119 = arith.addf %117, %118 : vector<8x128xf32>
    %120 = arith.negf %119 : vector<8x128xf32>
    %121 = math.exp %120 : vector<8x128xf32>
    %cst_32 = arith.constant 1.000000e+00 : f32
    %122 = vector.broadcast %cst_32 : f32 to vector<8x128xf32>
    %123 = arith.addf %122, %121 : vector<8x128xf32>
    %124 = arith.divf %122, %123 : vector<8x128xf32>
    %125 = math.tanh %119 : vector<8x128xf32>
    %126 = vector.extract_strided_slice %124 {offsets = [0, 0], sizes = [8, 32], strides = [1, 1]} : vector<8x128xf32> to vector<8x32xf32>
    %127 = vector.extract_strided_slice %124 {offsets = [0, 32], sizes = [8, 32], strides = [1, 1]} : vector<8x128xf32> to vector<8x32xf32>
    %128 = vector.extract_strided_slice %125 {offsets = [0, 64], sizes = [8, 32], strides = [1, 1]} : vector<8x128xf32> to vector<8x32xf32>
    %129 = vector.extract_strided_slice %124 {offsets = [0, 96], sizes = [8, 32], strides = [1, 1]} : vector<8x128xf32> to vector<8x32xf32>
    %130 = arith.mulf %127, %105 : vector<8x32xf32>
    %131 = arith.mulf %126, %128 : vector<8x32xf32>
    %132 = arith.addf %130, %131 : vector<8x32xf32>
    %133 = math.tanh %132 : vector<8x32xf32>
    %134 = arith.mulf %129, %133 : vector<8x32xf32>
    %135 = vector.broadcast %c3_i32 : i32 to vector<8x1xi32>
    %136 = arith.cmpi sgt, %1, %135 : vector<8x1xi32>
    %137 = vector.shape_cast %136 : vector<8x1xi1> to vector<8x1xi1>
    %138 = vector.broadcast %137 : vector<8x1xi1> to vector<8x32xi1>
    %139 = arith.select %138, %132, %105 : vector<8x32xi1>, vector<8x32xf32>
    %140 = arith.select %138, %134, %106 : vector<8x32xi1>, vector<8x32xf32>
    %cst_33 = arith.constant 0.000000e+00 : f32
    %141 = vector.broadcast %cst_33 : f32 to vector<8x32xf32>
    %142 = arith.cmpf oeq, %134, %141 : vector<8x32xf32>
    %143 = vector.broadcast %cst_14 : f32 to vector<8x32xf32>
    %144 = arith.select %142, %143, %134 : vector<8x32xi1>, vector<8x32xf32>
    %145 = vector.broadcast %cst_14 : f32 to vector<8x32xf32>
    %146 = arith.select %138, %144, %145 : vector<8x32xi1>, vector<8x32xf32>
    %147 = arith.maximumf %113, %146 : vector<8x32xf32>
    %c4_i32 = arith.constant 4 : i32
    %c8_i32_34 = arith.constant 8 : i32
    %148 = arith.muli %c4_i32, %c8_i32_34 : i32
    %149 = tpu.assume_multiple %148, 8 : i32
    %150 = arith.index_cast %149 : i32 to index
    %c0_35 = arith.constant 0 : index
    %151 = vector.load %arg11[%150, %c0_35] : memref<64x256xf32, #tpu.memory_space<vmem>>, vector<8x128xf32>
    %cst_36 = arith.constant dense<0.000000e+00> : vector<8x128xf32>
    %152 = tpu.matmul %140, %8, %cst_36 {dimension_numbers = #tpu.dot_dimension_numbers<[1], [0], [0], [1], [0, 0, 1, 1], [], []>} : vector<8x32xf32>, vector<32x128xf32>, vector<8x128xf32> -> vector<8x128xf32>
    %153 = arith.addf %151, %152 : vector<8x128xf32>
    %154 = arith.negf %153 : vector<8x128xf32>
    %155 = math.exp %154 : vector<8x128xf32>
    %cst_37 = arith.constant 1.000000e+00 : f32
    %156 = vector.broadcast %cst_37 : f32 to vector<8x128xf32>
    %157 = arith.addf %156, %155 : vector<8x128xf32>
    %158 = arith.divf %156, %157 : vector<8x128xf32>
    %159 = math.tanh %153 : vector<8x128xf32>
    %160 = vector.extract_strided_slice %158 {offsets = [0, 0], sizes = [8, 32], strides = [1, 1]} : vector<8x128xf32> to vector<8x32xf32>
    %161 = vector.extract_strided_slice %158 {offsets = [0, 32], sizes = [8, 32], strides = [1, 1]} : vector<8x128xf32> to vector<8x32xf32>
    %162 = vector.extract_strided_slice %159 {offsets = [0, 64], sizes = [8, 32], strides = [1, 1]} : vector<8x128xf32> to vector<8x32xf32>
    %163 = vector.extract_strided_slice %158 {offsets = [0, 96], sizes = [8, 32], strides = [1, 1]} : vector<8x128xf32> to vector<8x32xf32>
    %164 = arith.mulf %161, %139 : vector<8x32xf32>
    %165 = arith.mulf %160, %162 : vector<8x32xf32>
    %166 = arith.addf %164, %165 : vector<8x32xf32>
    %167 = math.tanh %166 : vector<8x32xf32>
    %168 = arith.mulf %163, %167 : vector<8x32xf32>
    %169 = vector.broadcast %c4_i32 : i32 to vector<8x1xi32>
    %170 = arith.cmpi sgt, %1, %169 : vector<8x1xi32>
    %171 = vector.shape_cast %170 : vector<8x1xi1> to vector<8x1xi1>
    %172 = vector.broadcast %171 : vector<8x1xi1> to vector<8x32xi1>
    %173 = arith.select %172, %166, %139 : vector<8x32xi1>, vector<8x32xf32>
    %174 = arith.select %172, %168, %140 : vector<8x32xi1>, vector<8x32xf32>
    %cst_38 = arith.constant 0.000000e+00 : f32
    %175 = vector.broadcast %cst_38 : f32 to vector<8x32xf32>
    %176 = arith.cmpf oeq, %168, %175 : vector<8x32xf32>
    %177 = vector.broadcast %cst_14 : f32 to vector<8x32xf32>
    %178 = arith.select %176, %177, %168 : vector<8x32xi1>, vector<8x32xf32>
    %179 = vector.broadcast %cst_14 : f32 to vector<8x32xf32>
    %180 = arith.select %172, %178, %179 : vector<8x32xi1>, vector<8x32xf32>
    %181 = arith.maximumf %147, %180 : vector<8x32xf32>
    %c5_i32 = arith.constant 5 : i32
    %c8_i32_39 = arith.constant 8 : i32
    %182 = arith.muli %c5_i32, %c8_i32_39 : i32
    %183 = tpu.assume_multiple %182, 8 : i32
    %184 = arith.index_cast %183 : i32 to index
    %c0_40 = arith.constant 0 : index
    %185 = vector.load %arg11[%184, %c0_40] : memref<64x256xf32, #tpu.memory_space<vmem>>, vector<8x128xf32>
    %cst_41 = arith.constant dense<0.000000e+00> : vector<8x128xf32>
    %186 = tpu.matmul %174, %8, %cst_41 {dimension_numbers = #tpu.dot_dimension_numbers<[1], [0], [0], [1], [0, 0, 1, 1], [], []>} : vector<8x32xf32>, vector<32x128xf32>, vector<8x128xf32> -> vector<8x128xf32>
    %187 = arith.addf %185, %186 : vector<8x128xf32>
    %188 = arith.negf %187 : vector<8x128xf32>
    %189 = math.exp %188 : vector<8x128xf32>
    %cst_42 = arith.constant 1.000000e+00 : f32
    %190 = vector.broadcast %cst_42 : f32 to vector<8x128xf32>
    %191 = arith.addf %190, %189 : vector<8x128xf32>
    %192 = arith.divf %190, %191 : vector<8x128xf32>
    %193 = math.tanh %187 : vector<8x128xf32>
    %194 = vector.extract_strided_slice %192 {offsets = [0, 0], sizes = [8, 32], strides = [1, 1]} : vector<8x128xf32> to vector<8x32xf32>
    %195 = vector.extract_strided_slice %192 {offsets = [0, 32], sizes = [8, 32], strides = [1, 1]} : vector<8x128xf32> to vector<8x32xf32>
    %196 = vector.extract_strided_slice %193 {offsets = [0, 64], sizes = [8, 32], strides = [1, 1]} : vector<8x128xf32> to vector<8x32xf32>
    %197 = vector.extract_strided_slice %192 {offsets = [0, 96], sizes = [8, 32], strides = [1, 1]} : vector<8x128xf32> to vector<8x32xf32>
    %198 = arith.mulf %195, %173 : vector<8x32xf32>
    %199 = arith.mulf %194, %196 : vector<8x32xf32>
    %200 = arith.addf %198, %199 : vector<8x32xf32>
    %201 = math.tanh %200 : vector<8x32xf32>
    %202 = arith.mulf %197, %201 : vector<8x32xf32>
    %203 = vector.broadcast %c5_i32 : i32 to vector<8x1xi32>
    %204 = arith.cmpi sgt, %1, %203 : vector<8x1xi32>
    %205 = vector.shape_cast %204 : vector<8x1xi1> to vector<8x1xi1>
    %206 = vector.broadcast %205 : vector<8x1xi1> to vector<8x32xi1>
    %207 = arith.select %206, %200, %173 : vector<8x32xi1>, vector<8x32xf32>
    %208 = arith.select %206, %202, %174 : vector<8x32xi1>, vector<8x32xf32>
    %cst_43 = arith.constant 0.000000e+00 : f32
    %209 = vector.broadcast %cst_43 : f32 to vector<8x32xf32>
    %210 = arith.cmpf oeq, %202, %209 : vector<8x32xf32>
    %211 = vector.broadcast %cst_14 : f32 to vector<8x32xf32>
    %212 = arith.select %210, %211, %202 : vector<8x32xi1>, vector<8x32xf32>
    %213 = vector.broadcast %cst_14 : f32 to vector<8x32xf32>
    %214 = arith.select %206, %212, %213 : vector<8x32xi1>, vector<8x32xf32>
    %215 = arith.maximumf %181, %214 : vector<8x32xf32>
    %c6_i32 = arith.constant 6 : i32
    %c8_i32_44 = arith.constant 8 : i32
    %216 = arith.muli %c6_i32, %c8_i32_44 : i32
    %217 = tpu.assume_multiple %216, 8 : i32
    %218 = arith.index_cast %217 : i32 to index
    %c0_45 = arith.constant 0 : index
    %219 = vector.load %arg11[%218, %c0_45] : memref<64x256xf32, #tpu.memory_space<vmem>>, vector<8x128xf32>
    %cst_46 = arith.constant dense<0.000000e+00> : vector<8x128xf32>
    %220 = tpu.matmul %208, %8, %cst_46 {dimension_numbers = #tpu.dot_dimension_numbers<[1], [0], [0], [1], [0, 0, 1, 1], [], []>} : vector<8x32xf32>, vector<32x128xf32>, vector<8x128xf32> -> vector<8x128xf32>
    %221 = arith.addf %219, %220 : vector<8x128xf32>
    %222 = arith.negf %221 : vector<8x128xf32>
    %223 = math.exp %222 : vector<8x128xf32>
    %cst_47 = arith.constant 1.000000e+00 : f32
    %224 = vector.broadcast %cst_47 : f32 to vector<8x128xf32>
    %225 = arith.addf %224, %223 : vector<8x128xf32>
    %226 = arith.divf %224, %225 : vector<8x128xf32>
    %227 = math.tanh %221 : vector<8x128xf32>
    %228 = vector.extract_strided_slice %226 {offsets = [0, 0], sizes = [8, 32], strides = [1, 1]} : vector<8x128xf32> to vector<8x32xf32>
    %229 = vector.extract_strided_slice %226 {offsets = [0, 32], sizes = [8, 32], strides = [1, 1]} : vector<8x128xf32> to vector<8x32xf32>
    %230 = vector.extract_strided_slice %227 {offsets = [0, 64], sizes = [8, 32], strides = [1, 1]} : vector<8x128xf32> to vector<8x32xf32>
    %231 = vector.extract_strided_slice %226 {offsets = [0, 96], sizes = [8, 32], strides = [1, 1]} : vector<8x128xf32> to vector<8x32xf32>
    %232 = arith.mulf %229, %207 : vector<8x32xf32>
    %233 = arith.mulf %228, %230 : vector<8x32xf32>
    %234 = arith.addf %232, %233 : vector<8x32xf32>
    %235 = math.tanh %234 : vector<8x32xf32>
    %236 = arith.mulf %231, %235 : vector<8x32xf32>
    %237 = vector.broadcast %c6_i32 : i32 to vector<8x1xi32>
    %238 = arith.cmpi sgt, %1, %237 : vector<8x1xi32>
    %239 = vector.shape_cast %238 : vector<8x1xi1> to vector<8x1xi1>
    %240 = vector.broadcast %239 : vector<8x1xi1> to vector<8x32xi1>
    %241 = arith.select %240, %234, %207 : vector<8x32xi1>, vector<8x32xf32>
    %242 = arith.select %240, %236, %208 : vector<8x32xi1>, vector<8x32xf32>
    %cst_48 = arith.constant 0.000000e+00 : f32
    %243 = vector.broadcast %cst_48 : f32 to vector<8x32xf32>
    %244 = arith.cmpf oeq, %236, %243 : vector<8x32xf32>
    %245 = vector.broadcast %cst_14 : f32 to vector<8x32xf32>
    %246 = arith.select %244, %245, %236 : vector<8x32xi1>, vector<8x32xf32>
    %247 = vector.broadcast %cst_14 : f32 to vector<8x32xf32>
    %248 = arith.select %240, %246, %247 : vector<8x32xi1>, vector<8x32xf32>
    %249 = arith.maximumf %215, %248 : vector<8x32xf32>
    %c7_i32 = arith.constant 7 : i32
    %c8_i32_49 = arith.constant 8 : i32
    %250 = arith.muli %c7_i32, %c8_i32_49 : i32
    %251 = tpu.assume_multiple %250, 8 : i32
    %252 = arith.index_cast %251 : i32 to index
    %c0_50 = arith.constant 0 : index
    %253 = vector.load %arg11[%252, %c0_50] : memref<64x256xf32, #tpu.memory_space<vmem>>, vector<8x128xf32>
    %cst_51 = arith.constant dense<0.000000e+00> : vector<8x128xf32>
    %254 = tpu.matmul %242, %8, %cst_51 {dimension_numbers = #tpu.dot_dimension_numbers<[1], [0], [0], [1], [0, 0, 1, 1], [], []>} : vector<8x32xf32>, vector<32x128xf32>, vector<8x128xf32> -> vector<8x128xf32>
    %255 = arith.addf %253, %254 : vector<8x128xf32>
    %256 = arith.negf %255 : vector<8x128xf32>
    %257 = math.exp %256 : vector<8x128xf32>
    %cst_52 = arith.constant 1.000000e+00 : f32
    %258 = vector.broadcast %cst_52 : f32 to vector<8x128xf32>
    %259 = arith.addf %258, %257 : vector<8x128xf32>
    %260 = arith.divf %258, %259 : vector<8x128xf32>
    %261 = math.tanh %255 : vector<8x128xf32>
    %262 = vector.extract_strided_slice %260 {offsets = [0, 0], sizes = [8, 32], strides = [1, 1]} : vector<8x128xf32> to vector<8x32xf32>
    %263 = vector.extract_strided_slice %260 {offsets = [0, 32], sizes = [8, 32], strides = [1, 1]} : vector<8x128xf32> to vector<8x32xf32>
    %264 = vector.extract_strided_slice %261 {offsets = [0, 64], sizes = [8, 32], strides = [1, 1]} : vector<8x128xf32> to vector<8x32xf32>
    %265 = vector.extract_strided_slice %260 {offsets = [0, 96], sizes = [8, 32], strides = [1, 1]} : vector<8x128xf32> to vector<8x32xf32>
    %266 = arith.mulf %263, %241 : vector<8x32xf32>
    %267 = arith.mulf %262, %264 : vector<8x32xf32>
    %268 = arith.addf %266, %267 : vector<8x32xf32>
    %269 = math.tanh %268 : vector<8x32xf32>
    %270 = arith.mulf %265, %269 : vector<8x32xf32>
    %271 = vector.broadcast %c7_i32 : i32 to vector<8x1xi32>
    %272 = arith.cmpi sgt, %1, %271 : vector<8x1xi32>
    %273 = vector.shape_cast %272 : vector<8x1xi1> to vector<8x1xi1>
    %274 = vector.broadcast %273 : vector<8x1xi1> to vector<8x32xi1>
    %275 = arith.select %274, %268, %241 : vector<8x32xi1>, vector<8x32xf32>
    %276 = arith.select %274, %270, %242 : vector<8x32xi1>, vector<8x32xf32>
    %cst_53 = arith.constant 0.000000e+00 : f32
    %277 = vector.broadcast %cst_53 : f32 to vector<8x32xf32>
    %278 = arith.cmpf oeq, %270, %277 : vector<8x32xf32>
    %279 = vector.broadcast %cst_14 : f32 to vector<8x32xf32>
    %280 = arith.select %278, %279, %270 : vector<8x32xi1>, vector<8x32xf32>
    %281 = vector.broadcast %cst_14 : f32 to vector<8x32xf32>
    %282 = arith.select %274, %280, %281 : vector<8x32xi1>, vector<8x32xf32>
    %283 = arith.maximumf %249, %282 : vector<8x32xf32>
    %c8_i32_54 = arith.constant 8 : i32
    %c0_55 = arith.constant 0 : index
    %c0_56 = arith.constant 0 : index
    %284 = vector.load %arg5[%c0_55, %c0_56] : memref<32x128xf32, #tpu.memory_space<vmem>>, vector<32x128xf32>
    %cst_57 = arith.constant 0.000000e+00 : f32
    %285 = vector.broadcast %cst_57 : f32 to vector<8x32xf32>
    %cst_58 = arith.constant 0.000000e+00 : f32
    %286 = vector.broadcast %cst_58 : f32 to vector<8x32xf32>
    %cst_59 = arith.constant -1.000000e+08 : f32
    %287 = vector.broadcast %cst_59 : f32 to vector<8x32xf32>
    %cst_60 = arith.constant -1.000000e+08 : f32
    %c0_i32_61 = arith.constant 0 : i32
    %c7_i32_62 = arith.constant 7 : i32
    %288 = arith.subi %c7_i32_62, %c0_i32_61 : i32
    %c8_i32_63 = arith.constant 8 : i32
    %289 = arith.muli %288, %c8_i32_63 : i32
    %290 = tpu.assume_multiple %289, 8 : i32
    %291 = arith.index_cast %290 : i32 to index
    %c128 = arith.constant 128 : index
    %292 = vector.load %arg11[%291, %c128] : memref<64x256xf32, #tpu.memory_space<vmem>>, vector<8x128xf32>
    %cst_64 = arith.constant dense<0.000000e+00> : vector<8x128xf32>
    %293 = tpu.matmul %285, %284, %cst_64 {dimension_numbers = #tpu.dot_dimension_numbers<[1], [0], [0], [1], [0, 0, 1, 1], [], []>} : vector<8x32xf32>, vector<32x128xf32>, vector<8x128xf32> -> vector<8x128xf32>
    %294 = arith.addf %292, %293 : vector<8x128xf32>
    %295 = arith.negf %294 : vector<8x128xf32>
    %296 = math.exp %295 : vector<8x128xf32>
    %cst_65 = arith.constant 1.000000e+00 : f32
    %297 = vector.broadcast %cst_65 : f32 to vector<8x128xf32>
    %298 = arith.addf %297, %296 : vector<8x128xf32>
    %299 = arith.divf %297, %298 : vector<8x128xf32>
    %300 = math.tanh %294 : vector<8x128xf32>
    %301 = vector.extract_strided_slice %299 {offsets = [0, 0], sizes = [8, 32], strides = [1, 1]} : vector<8x128xf32> to vector<8x32xf32>
    %302 = vector.extract_strided_slice %299 {offsets = [0, 32], sizes = [8, 32], strides = [1, 1]} : vector<8x128xf32> to vector<8x32xf32>
    %303 = vector.extract_strided_slice %300 {offsets = [0, 64], sizes = [8, 32], strides = [1, 1]} : vector<8x128xf32> to vector<8x32xf32>
    %304 = vector.extract_strided_slice %299 {offsets = [0, 96], sizes = [8, 32], strides = [1, 1]} : vector<8x128xf32> to vector<8x32xf32>
    %305 = arith.mulf %302, %286 : vector<8x32xf32>
    %306 = arith.mulf %301, %303 : vector<8x32xf32>
    %307 = arith.addf %305, %306 : vector<8x32xf32>
    %308 = math.tanh %307 : vector<8x32xf32>
    %309 = arith.mulf %304, %308 : vector<8x32xf32>
    %310 = vector.broadcast %288 : i32 to vector<8x1xi32>
    %311 = arith.cmpi sgt, %1, %310 : vector<8x1xi32>
    %312 = vector.shape_cast %311 : vector<8x1xi1> to vector<8x1xi1>
    %313 = vector.broadcast %312 : vector<8x1xi1> to vector<8x32xi1>
    %314 = arith.select %313, %307, %286 : vector<8x32xi1>, vector<8x32xf32>
    %315 = arith.select %313, %309, %285 : vector<8x32xi1>, vector<8x32xf32>
    %cst_66 = arith.constant 0.000000e+00 : f32
    %316 = vector.broadcast %cst_66 : f32 to vector<8x32xf32>
    %317 = arith.cmpf oeq, %309, %316 : vector<8x32xf32>
    %318 = vector.broadcast %cst_60 : f32 to vector<8x32xf32>
    %319 = arith.select %317, %318, %309 : vector<8x32xi1>, vector<8x32xf32>
    %320 = vector.broadcast %cst_60 : f32 to vector<8x32xf32>
    %321 = arith.select %313, %319, %320 : vector<8x32xi1>, vector<8x32xf32>
    %322 = arith.maximumf %287, %321 : vector<8x32xf32>
    %c1_i32_67 = arith.constant 1 : i32
    %c7_i32_68 = arith.constant 7 : i32
    %323 = arith.subi %c7_i32_68, %c1_i32_67 : i32
    %c8_i32_69 = arith.constant 8 : i32
    %324 = arith.muli %323, %c8_i32_69 : i32
    %325 = tpu.assume_multiple %324, 8 : i32
    %326 = arith.index_cast %325 : i32 to index
    %c128_70 = arith.constant 128 : index
    %327 = vector.load %arg11[%326, %c128_70] : memref<64x256xf32, #tpu.memory_space<vmem>>, vector<8x128xf32>
    %cst_71 = arith.constant dense<0.000000e+00> : vector<8x128xf32>
    %328 = tpu.matmul %315, %284, %cst_71 {dimension_numbers = #tpu.dot_dimension_numbers<[1], [0], [0], [1], [0, 0, 1, 1], [], []>} : vector<8x32xf32>, vector<32x128xf32>, vector<8x128xf32> -> vector<8x128xf32>
    %329 = arith.addf %327, %328 : vector<8x128xf32>
    %330 = arith.negf %329 : vector<8x128xf32>
    %331 = math.exp %330 : vector<8x128xf32>
    %cst_72 = arith.constant 1.000000e+00 : f32
    %332 = vector.broadcast %cst_72 : f32 to vector<8x128xf32>
    %333 = arith.addf %332, %331 : vector<8x128xf32>
    %334 = arith.divf %332, %333 : vector<8x128xf32>
    %335 = math.tanh %329 : vector<8x128xf32>
    %336 = vector.extract_strided_slice %334 {offsets = [0, 0], sizes = [8, 32], strides = [1, 1]} : vector<8x128xf32> to vector<8x32xf32>
    %337 = vector.extract_strided_slice %334 {offsets = [0, 32], sizes = [8, 32], strides = [1, 1]} : vector<8x128xf32> to vector<8x32xf32>
    %338 = vector.extract_strided_slice %335 {offsets = [0, 64], sizes = [8, 32], strides = [1, 1]} : vector<8x128xf32> to vector<8x32xf32>
    %339 = vector.extract_strided_slice %334 {offsets = [0, 96], sizes = [8, 32], strides = [1, 1]} : vector<8x128xf32> to vector<8x32xf32>
    %340 = arith.mulf %337, %314 : vector<8x32xf32>
    %341 = arith.mulf %336, %338 : vector<8x32xf32>
    %342 = arith.addf %340, %341 : vector<8x32xf32>
    %343 = math.tanh %342 : vector<8x32xf32>
    %344 = arith.mulf %339, %343 : vector<8x32xf32>
    %345 = vector.broadcast %323 : i32 to vector<8x1xi32>
    %346 = arith.cmpi sgt, %1, %345 : vector<8x1xi32>
    %347 = vector.shape_cast %346 : vector<8x1xi1> to vector<8x1xi1>
    %348 = vector.broadcast %347 : vector<8x1xi1> to vector<8x32xi1>
    %349 = arith.select %348, %342, %314 : vector<8x32xi1>, vector<8x32xf32>
    %350 = arith.select %348, %344, %315 : vector<8x32xi1>, vector<8x32xf32>
    %cst_73 = arith.constant 0.000000e+00 : f32
    %351 = vector.broadcast %cst_73 : f32 to vector<8x32xf32>
    %352 = arith.cmpf oeq, %344, %351 : vector<8x32xf32>
    %353 = vector.broadcast %cst_60 : f32 to vector<8x32xf32>
    %354 = arith.select %352, %353, %344 : vector<8x32xi1>, vector<8x32xf32>
    %355 = vector.broadcast %cst_60 : f32 to vector<8x32xf32>
    %356 = arith.select %348, %354, %355 : vector<8x32xi1>, vector<8x32xf32>
    %357 = arith.maximumf %322, %356 : vector<8x32xf32>
    %c2_i32_74 = arith.constant 2 : i32
    %c7_i32_75 = arith.constant 7 : i32
    %358 = arith.subi %c7_i32_75, %c2_i32_74 : i32
    %c8_i32_76 = arith.constant 8 : i32
    %359 = arith.muli %358, %c8_i32_76 : i32
    %360 = tpu.assume_multiple %359, 8 : i32
    %361 = arith.index_cast %360 : i32 to index
    %c128_77 = arith.constant 128 : index
    %362 = vector.load %arg11[%361, %c128_77] : memref<64x256xf32, #tpu.memory_space<vmem>>, vector<8x128xf32>
    %cst_78 = arith.constant dense<0.000000e+00> : vector<8x128xf32>
    %363 = tpu.matmul %350, %284, %cst_78 {dimension_numbers = #tpu.dot_dimension_numbers<[1], [0], [0], [1], [0, 0, 1, 1], [], []>} : vector<8x32xf32>, vector<32x128xf32>, vector<8x128xf32> -> vector<8x128xf32>
    %364 = arith.addf %362, %363 : vector<8x128xf32>
    %365 = arith.negf %364 : vector<8x128xf32>
    %366 = math.exp %365 : vector<8x128xf32>
    %cst_79 = arith.constant 1.000000e+00 : f32
    %367 = vector.broadcast %cst_79 : f32 to vector<8x128xf32>
    %368 = arith.addf %367, %366 : vector<8x128xf32>
    %369 = arith.divf %367, %368 : vector<8x128xf32>
    %370 = math.tanh %364 : vector<8x128xf32>
    %371 = vector.extract_strided_slice %369 {offsets = [0, 0], sizes = [8, 32], strides = [1, 1]} : vector<8x128xf32> to vector<8x32xf32>
    %372 = vector.extract_strided_slice %369 {offsets = [0, 32], sizes = [8, 32], strides = [1, 1]} : vector<8x128xf32> to vector<8x32xf32>
    %373 = vector.extract_strided_slice %370 {offsets = [0, 64], sizes = [8, 32], strides = [1, 1]} : vector<8x128xf32> to vector<8x32xf32>
    %374 = vector.extract_strided_slice %369 {offsets = [0, 96], sizes = [8, 32], strides = [1, 1]} : vector<8x128xf32> to vector<8x32xf32>
    %375 = arith.mulf %372, %349 : vector<8x32xf32>
    %376 = arith.mulf %371, %373 : vector<8x32xf32>
    %377 = arith.addf %375, %376 : vector<8x32xf32>
    %378 = math.tanh %377 : vector<8x32xf32>
    %379 = arith.mulf %374, %378 : vector<8x32xf32>
    %380 = vector.broadcast %358 : i32 to vector<8x1xi32>
    %381 = arith.cmpi sgt, %1, %380 : vector<8x1xi32>
    %382 = vector.shape_cast %381 : vector<8x1xi1> to vector<8x1xi1>
    %383 = vector.broadcast %382 : vector<8x1xi1> to vector<8x32xi1>
    %384 = arith.select %383, %377, %349 : vector<8x32xi1>, vector<8x32xf32>
    %385 = arith.select %383, %379, %350 : vector<8x32xi1>, vector<8x32xf32>
    %cst_80 = arith.constant 0.000000e+00 : f32
    %386 = vector.broadcast %cst_80 : f32 to vector<8x32xf32>
    %387 = arith.cmpf oeq, %379, %386 : vector<8x32xf32>
    %388 = vector.broadcast %cst_60 : f32 to vector<8x32xf32>
    %389 = arith.select %387, %388, %379 : vector<8x32xi1>, vector<8x32xf32>
    %390 = vector.broadcast %cst_60 : f32 to vector<8x32xf32>
    %391 = arith.select %383, %389, %390 : vector<8x32xi1>, vector<8x32xf32>
    %392 = arith.maximumf %357, %391 : vector<8x32xf32>
    %c3_i32_81 = arith.constant 3 : i32
    %c7_i32_82 = arith.constant 7 : i32
    %393 = arith.subi %c7_i32_82, %c3_i32_81 : i32
    %c8_i32_83 = arith.constant 8 : i32
    %394 = arith.muli %393, %c8_i32_83 : i32
    %395 = tpu.assume_multiple %394, 8 : i32
    %396 = arith.index_cast %395 : i32 to index
    %c128_84 = arith.constant 128 : index
    %397 = vector.load %arg11[%396, %c128_84] : memref<64x256xf32, #tpu.memory_space<vmem>>, vector<8x128xf32>
    %cst_85 = arith.constant dense<0.000000e+00> : vector<8x128xf32>
    %398 = tpu.matmul %385, %284, %cst_85 {dimension_numbers = #tpu.dot_dimension_numbers<[1], [0], [0], [1], [0, 0, 1, 1], [], []>} : vector<8x32xf32>, vector<32x128xf32>, vector<8x128xf32> -> vector<8x128xf32>
    %399 = arith.addf %397, %398 : vector<8x128xf32>
    %400 = arith.negf %399 : vector<8x128xf32>
    %401 = math.exp %400 : vector<8x128xf32>
    %cst_86 = arith.constant 1.000000e+00 : f32
    %402 = vector.broadcast %cst_86 : f32 to vector<8x128xf32>
    %403 = arith.addf %402, %401 : vector<8x128xf32>
    %404 = arith.divf %402, %403 : vector<8x128xf32>
    %405 = math.tanh %399 : vector<8x128xf32>
    %406 = vector.extract_strided_slice %404 {offsets = [0, 0], sizes = [8, 32], strides = [1, 1]} : vector<8x128xf32> to vector<8x32xf32>
    %407 = vector.extract_strided_slice %404 {offsets = [0, 32], sizes = [8, 32], strides = [1, 1]} : vector<8x128xf32> to vector<8x32xf32>
    %408 = vector.extract_strided_slice %405 {offsets = [0, 64], sizes = [8, 32], strides = [1, 1]} : vector<8x128xf32> to vector<8x32xf32>
    %409 = vector.extract_strided_slice %404 {offsets = [0, 96], sizes = [8, 32], strides = [1, 1]} : vector<8x128xf32> to vector<8x32xf32>
    %410 = arith.mulf %407, %384 : vector<8x32xf32>
    %411 = arith.mulf %406, %408 : vector<8x32xf32>
    %412 = arith.addf %410, %411 : vector<8x32xf32>
    %413 = math.tanh %412 : vector<8x32xf32>
    %414 = arith.mulf %409, %413 : vector<8x32xf32>
    %415 = vector.broadcast %393 : i32 to vector<8x1xi32>
    %416 = arith.cmpi sgt, %1, %415 : vector<8x1xi32>
    %417 = vector.shape_cast %416 : vector<8x1xi1> to vector<8x1xi1>
    %418 = vector.broadcast %417 : vector<8x1xi1> to vector<8x32xi1>
    %419 = arith.select %418, %412, %384 : vector<8x32xi1>, vector<8x32xf32>
    %420 = arith.select %418, %414, %385 : vector<8x32xi1>, vector<8x32xf32>
    %cst_87 = arith.constant 0.000000e+00 : f32
    %421 = vector.broadcast %cst_87 : f32 to vector<8x32xf32>
    %422 = arith.cmpf oeq, %414, %421 : vector<8x32xf32>
    %423 = vector.broadcast %cst_60 : f32 to vector<8x32xf32>
    %424 = arith.select %422, %423, %414 : vector<8x32xi1>, vector<8x32xf32>
    %425 = vector.broadcast %cst_60 : f32 to vector<8x32xf32>
    %426 = arith.select %418, %424, %425 : vector<8x32xi1>, vector<8x32xf32>
    %427 = arith.maximumf %392, %426 : vector<8x32xf32>
    %c4_i32_88 = arith.constant 4 : i32
    %c7_i32_89 = arith.constant 7 : i32
    %428 = arith.subi %c7_i32_89, %c4_i32_88 : i32
    %c8_i32_90 = arith.constant 8 : i32
    %429 = arith.muli %428, %c8_i32_90 : i32
    %430 = tpu.assume_multiple %429, 8 : i32
    %431 = arith.index_cast %430 : i32 to index
    %c128_91 = arith.constant 128 : index
    %432 = vector.load %arg11[%431, %c128_91] : memref<64x256xf32, #tpu.memory_space<vmem>>, vector<8x128xf32>
    %cst_92 = arith.constant dense<0.000000e+00> : vector<8x128xf32>
    %433 = tpu.matmul %420, %284, %cst_92 {dimension_numbers = #tpu.dot_dimension_numbers<[1], [0], [0], [1], [0, 0, 1, 1], [], []>} : vector<8x32xf32>, vector<32x128xf32>, vector<8x128xf32> -> vector<8x128xf32>
    %434 = arith.addf %432, %433 : vector<8x128xf32>
    %435 = arith.negf %434 : vector<8x128xf32>
    %436 = math.exp %435 : vector<8x128xf32>
    %cst_93 = arith.constant 1.000000e+00 : f32
    %437 = vector.broadcast %cst_93 : f32 to vector<8x128xf32>
    %438 = arith.addf %437, %436 : vector<8x128xf32>
    %439 = arith.divf %437, %438 : vector<8x128xf32>
    %440 = math.tanh %434 : vector<8x128xf32>
    %441 = vector.extract_strided_slice %439 {offsets = [0, 0], sizes = [8, 32], strides = [1, 1]} : vector<8x128xf32> to vector<8x32xf32>
    %442 = vector.extract_strided_slice %439 {offsets = [0, 32], sizes = [8, 32], strides = [1, 1]} : vector<8x128xf32> to vector<8x32xf32>
    %443 = vector.extract_strided_slice %440 {offsets = [0, 64], sizes = [8, 32], strides = [1, 1]} : vector<8x128xf32> to vector<8x32xf32>
    %444 = vector.extract_strided_slice %439 {offsets = [0, 96], sizes = [8, 32], strides = [1, 1]} : vector<8x128xf32> to vector<8x32xf32>
    %445 = arith.mulf %442, %419 : vector<8x32xf32>
    %446 = arith.mulf %441, %443 : vector<8x32xf32>
    %447 = arith.addf %445, %446 : vector<8x32xf32>
    %448 = math.tanh %447 : vector<8x32xf32>
    %449 = arith.mulf %444, %448 : vector<8x32xf32>
    %450 = vector.broadcast %428 : i32 to vector<8x1xi32>
    %451 = arith.cmpi sgt, %1, %450 : vector<8x1xi32>
    %452 = vector.shape_cast %451 : vector<8x1xi1> to vector<8x1xi1>
    %453 = vector.broadcast %452 : vector<8x1xi1> to vector<8x32xi1>
    %454 = arith.select %453, %447, %419 : vector<8x32xi1>, vector<8x32xf32>
    %455 = arith.select %453, %449, %420 : vector<8x32xi1>, vector<8x32xf32>
    %cst_94 = arith.constant 0.000000e+00 : f32
    %456 = vector.broadcast %cst_94 : f32 to vector<8x32xf32>
    %457 = arith.cmpf oeq, %449, %456 : vector<8x32xf32>
    %458 = vector.broadcast %cst_60 : f32 to vector<8x32xf32>
    %459 = arith.select %457, %458, %449 : vector<8x32xi1>, vector<8x32xf32>
    %460 = vector.broadcast %cst_60 : f32 to vector<8x32xf32>
    %461 = arith.select %453, %459, %460 : vector<8x32xi1>, vector<8x32xf32>
    %462 = arith.maximumf %427, %461 : vector<8x32xf32>
    %c5_i32_95 = arith.constant 5 : i32
    %c7_i32_96 = arith.constant 7 : i32
    %463 = arith.subi %c7_i32_96, %c5_i32_95 : i32
    %c8_i32_97 = arith.constant 8 : i32
    %464 = arith.muli %463, %c8_i32_97 : i32
    %465 = tpu.assume_multiple %464, 8 : i32
    %466 = arith.index_cast %465 : i32 to index
    %c128_98 = arith.constant 128 : index
    %467 = vector.load %arg11[%466, %c128_98] : memref<64x256xf32, #tpu.memory_space<vmem>>, vector<8x128xf32>
    %cst_99 = arith.constant dense<0.000000e+00> : vector<8x128xf32>
    %468 = tpu.matmul %455, %284, %cst_99 {dimension_numbers = #tpu.dot_dimension_numbers<[1], [0], [0], [1], [0, 0, 1, 1], [], []>} : vector<8x32xf32>, vector<32x128xf32>, vector<8x128xf32> -> vector<8x128xf32>
    %469 = arith.addf %467, %468 : vector<8x128xf32>
    %470 = arith.negf %469 : vector<8x128xf32>
    %471 = math.exp %470 : vector<8x128xf32>
    %cst_100 = arith.constant 1.000000e+00 : f32
    %472 = vector.broadcast %cst_100 : f32 to vector<8x128xf32>
    %473 = arith.addf %472, %471 : vector<8x128xf32>
    %474 = arith.divf %472, %473 : vector<8x128xf32>
    %475 = math.tanh %469 : vector<8x128xf32>
    %476 = vector.extract_strided_slice %474 {offsets = [0, 0], sizes = [8, 32], strides = [1, 1]} : vector<8x128xf32> to vector<8x32xf32>
    %477 = vector.extract_strided_slice %474 {offsets = [0, 32], sizes = [8, 32], strides = [1, 1]} : vector<8x128xf32> to vector<8x32xf32>
    %478 = vector.extract_strided_slice %475 {offsets = [0, 64], sizes = [8, 32], strides = [1, 1]} : vector<8x128xf32> to vector<8x32xf32>
    %479 = vector.extract_strided_slice %474 {offsets = [0, 96], sizes = [8, 32], strides = [1, 1]} : vector<8x128xf32> to vector<8x32xf32>
    %480 = arith.mulf %477, %454 : vector<8x32xf32>
    %481 = arith.mulf %476, %478 : vector<8x32xf32>
    %482 = arith.addf %480, %481 : vector<8x32xf32>
    %483 = math.tanh %482 : vector<8x32xf32>
    %484 = arith.mulf %479, %483 : vector<8x32xf32>
    %485 = vector.broadcast %463 : i32 to vector<8x1xi32>
    %486 = arith.cmpi sgt, %1, %485 : vector<8x1xi32>
    %487 = vector.shape_cast %486 : vector<8x1xi1> to vector<8x1xi1>
    %488 = vector.broadcast %487 : vector<8x1xi1> to vector<8x32xi1>
    %489 = arith.select %488, %482, %454 : vector<8x32xi1>, vector<8x32xf32>
    %490 = arith.select %488, %484, %455 : vector<8x32xi1>, vector<8x32xf32>
    %cst_101 = arith.constant 0.000000e+00 : f32
    %491 = vector.broadcast %cst_101 : f32 to vector<8x32xf32>
    %492 = arith.cmpf oeq, %484, %491 : vector<8x32xf32>
    %493 = vector.broadcast %cst_60 : f32 to vector<8x32xf32>
    %494 = arith.select %492, %493, %484 : vector<8x32xi1>, vector<8x32xf32>
    %495 = vector.broadcast %cst_60 : f32 to vector<8x32xf32>
    %496 = arith.select %488, %494, %495 : vector<8x32xi1>, vector<8x32xf32>
    %497 = arith.maximumf %462, %496 : vector<8x32xf32>
    %c6_i32_102 = arith.constant 6 : i32
    %c7_i32_103 = arith.constant 7 : i32
    %498 = arith.subi %c7_i32_103, %c6_i32_102 : i32
    %c8_i32_104 = arith.constant 8 : i32
    %499 = arith.muli %498, %c8_i32_104 : i32
    %500 = tpu.assume_multiple %499, 8 : i32
    %501 = arith.index_cast %500 : i32 to index
    %c128_105 = arith.constant 128 : index
    %502 = vector.load %arg11[%501, %c128_105] : memref<64x256xf32, #tpu.memory_space<vmem>>, vector<8x128xf32>
    %cst_106 = arith.constant dense<0.000000e+00> : vector<8x128xf32>
    %503 = tpu.matmul %490, %284, %cst_106 {dimension_numbers = #tpu.dot_dimension_numbers<[1], [0], [0], [1], [0, 0, 1, 1], [], []>} : vector<8x32xf32>, vector<32x128xf32>, vector<8x128xf32> -> vector<8x128xf32>
    %504 = arith.addf %502, %503 : vector<8x128xf32>
    %505 = arith.negf %504 : vector<8x128xf32>
    %506 = math.exp %505 : vector<8x128xf32>
    %cst_107 = arith.constant 1.000000e+00 : f32
    %507 = vector.broadcast %cst_107 : f32 to vector<8x128xf32>
    %508 = arith.addf %507, %506 : vector<8x128xf32>
    %509 = arith.divf %507, %508 : vector<8x128xf32>
    %510 = math.tanh %504 : vector<8x128xf32>
    %511 = vector.extract_strided_slice %509 {offsets = [0, 0], sizes = [8, 32], strides = [1, 1]} : vector<8x128xf32> to vector<8x32xf32>
    %512 = vector.extract_strided_slice %509 {offsets = [0, 32], sizes = [8, 32], strides = [1, 1]} : vector<8x128xf32> to vector<8x32xf32>
    %513 = vector.extract_strided_slice %510 {offsets = [0, 64], sizes = [8, 32], strides = [1, 1]} : vector<8x128xf32> to vector<8x32xf32>
    %514 = vector.extract_strided_slice %509 {offsets = [0, 96], sizes = [8, 32], strides = [1, 1]} : vector<8x128xf32> to vector<8x32xf32>
    %515 = arith.mulf %512, %489 : vector<8x32xf32>
    %516 = arith.mulf %511, %513 : vector<8x32xf32>
    %517 = arith.addf %515, %516 : vector<8x32xf32>
    %518 = math.tanh %517 : vector<8x32xf32>
    %519 = arith.mulf %514, %518 : vector<8x32xf32>
    %520 = vector.broadcast %498 : i32 to vector<8x1xi32>
    %521 = arith.cmpi sgt, %1, %520 : vector<8x1xi32>
    %522 = vector.shape_cast %521 : vector<8x1xi1> to vector<8x1xi1>
    %523 = vector.broadcast %522 : vector<8x1xi1> to vector<8x32xi1>
    %524 = arith.select %523, %517, %489 : vector<8x32xi1>, vector<8x32xf32>
    %525 = arith.select %523, %519, %490 : vector<8x32xi1>, vector<8x32xf32>
    %cst_108 = arith.constant 0.000000e+00 : f32
    %526 = vector.broadcast %cst_108 : f32 to vector<8x32xf32>
    %527 = arith.cmpf oeq, %519, %526 : vector<8x32xf32>
    %528 = vector.broadcast %cst_60 : f32 to vector<8x32xf32>
    %529 = arith.select %527, %528, %519 : vector<8x32xi1>, vector<8x32xf32>
    %530 = vector.broadcast %cst_60 : f32 to vector<8x32xf32>
    %531 = arith.select %523, %529, %530 : vector<8x32xi1>, vector<8x32xf32>
    %532 = arith.maximumf %497, %531 : vector<8x32xf32>
    %c7_i32_109 = arith.constant 7 : i32
    %c7_i32_110 = arith.constant 7 : i32
    %533 = arith.subi %c7_i32_110, %c7_i32_109 : i32
    %c8_i32_111 = arith.constant 8 : i32
    %534 = arith.muli %533, %c8_i32_111 : i32
    %535 = tpu.assume_multiple %534, 8 : i32
    %536 = arith.index_cast %535 : i32 to index
    %c128_112 = arith.constant 128 : index
    %537 = vector.load %arg11[%536, %c128_112] : memref<64x256xf32, #tpu.memory_space<vmem>>, vector<8x128xf32>
    %cst_113 = arith.constant dense<0.000000e+00> : vector<8x128xf32>
    %538 = tpu.matmul %525, %284, %cst_113 {dimension_numbers = #tpu.dot_dimension_numbers<[1], [0], [0], [1], [0, 0, 1, 1], [], []>} : vector<8x32xf32>, vector<32x128xf32>, vector<8x128xf32> -> vector<8x128xf32>
    %539 = arith.addf %537, %538 : vector<8x128xf32>
    %540 = arith.negf %539 : vector<8x128xf32>
    %541 = math.exp %540 : vector<8x128xf32>
    %cst_114 = arith.constant 1.000000e+00 : f32
    %542 = vector.broadcast %cst_114 : f32 to vector<8x128xf32>
    %543 = arith.addf %542, %541 : vector<8x128xf32>
    %544 = arith.divf %542, %543 : vector<8x128xf32>
    %545 = math.tanh %539 : vector<8x128xf32>
    %546 = vector.extract_strided_slice %544 {offsets = [0, 0], sizes = [8, 32], strides = [1, 1]} : vector<8x128xf32> to vector<8x32xf32>
    %547 = vector.extract_strided_slice %544 {offsets = [0, 32], sizes = [8, 32], strides = [1, 1]} : vector<8x128xf32> to vector<8x32xf32>
    %548 = vector.extract_strided_slice %545 {offsets = [0, 64], sizes = [8, 32], strides = [1, 1]} : vector<8x128xf32> to vector<8x32xf32>
    %549 = vector.extract_strided_slice %544 {offsets = [0, 96], sizes = [8, 32], strides = [1, 1]} : vector<8x128xf32> to vector<8x32xf32>
    %550 = arith.mulf %547, %524 : vector<8x32xf32>
    %551 = arith.mulf %546, %548 : vector<8x32xf32>
    %552 = arith.addf %550, %551 : vector<8x32xf32>
    %553 = math.tanh %552 : vector<8x32xf32>
    %554 = arith.mulf %549, %553 : vector<8x32xf32>
    %555 = vector.broadcast %533 : i32 to vector<8x1xi32>
    %556 = arith.cmpi sgt, %1, %555 : vector<8x1xi32>
    %557 = vector.shape_cast %556 : vector<8x1xi1> to vector<8x1xi1>
    %558 = vector.broadcast %557 : vector<8x1xi1> to vector<8x32xi1>
    %559 = arith.select %558, %552, %524 : vector<8x32xi1>, vector<8x32xf32>
    %560 = arith.select %558, %554, %525 : vector<8x32xi1>, vector<8x32xf32>
    %cst_115 = arith.constant 0.000000e+00 : f32
    %561 = vector.broadcast %cst_115 : f32 to vector<8x32xf32>
    %562 = arith.cmpf oeq, %554, %561 : vector<8x32xf32>
    %563 = vector.broadcast %cst_60 : f32 to vector<8x32xf32>
    %564 = arith.select %562, %563, %554 : vector<8x32xi1>, vector<8x32xf32>
    %565 = vector.broadcast %cst_60 : f32 to vector<8x32xf32>
    %566 = arith.select %558, %564, %565 : vector<8x32xi1>, vector<8x32xf32>
    %567 = arith.maximumf %532, %566 : vector<8x32xf32>
    %c8_i32_116 = arith.constant 8 : i32
    %c0_117 = arith.constant 0 : index
    %c0_118 = arith.constant 0 : index
    %568 = vector.load %arg6[%c0_117, %c0_118] : memref<64x64xf32, #tpu.memory_space<vmem>>, vector<32x64xf32>
    %cst_119 = arith.constant dense<0.000000e+00> : vector<8x64xf32>
    %569 = tpu.matmul %283, %568, %cst_119 {dimension_numbers = #tpu.dot_dimension_numbers<[1], [0], [0], [1], [0, 0, 1, 1], [], []>} : vector<8x32xf32>, vector<32x64xf32>, vector<8x64xf32> -> vector<8x64xf32>
    %c32 = arith.constant 32 : index
    %c0_120 = arith.constant 0 : index
    %570 = vector.load %arg6[%c32, %c0_120] : memref<64x64xf32, #tpu.memory_space<vmem>>, vector<32x64xf32>
    %cst_121 = arith.constant dense<0.000000e+00> : vector<8x64xf32>
    %571 = tpu.matmul %567, %570, %cst_121 {dimension_numbers = #tpu.dot_dimension_numbers<[1], [0], [0], [1], [0, 0, 1, 1], [], []>} : vector<8x32xf32>, vector<32x64xf32>, vector<8x64xf32> -> vector<8x64xf32>
    %572 = arith.addf %569, %571 : vector<8x64xf32>
    %c0_122 = arith.constant 0 : index
    %c0_123 = arith.constant 0 : index
    %573 = vector.load %arg7[%c0_122, %c0_123] : memref<1x64xf32, #tpu.memory_space<vmem>>, vector<1x64xf32>
    %574 = vector.broadcast %573 : vector<1x64xf32> to vector<8x64xf32>
    %575 = arith.addf %572, %574 : vector<8x64xf32>
    %cst_124 = arith.constant 0.000000e+00 : f32
    %576 = vector.broadcast %cst_124 : f32 to vector<8x64xf32>
    %577 = arith.maximumf %575, %576 : vector<8x64xf32>
    %c0_125 = arith.constant 0 : index
    %c0_126 = arith.constant 0 : index
    %578 = vector.load %arg8[%c0_125, %c0_126] : memref<64x4xf32, #tpu.memory_space<vmem>>, vector<64x4xf32>
    %cst_127 = arith.constant dense<0.000000e+00> : vector<8x4xf32>
    %579 = tpu.matmul %577, %578, %cst_127 {dimension_numbers = #tpu.dot_dimension_numbers<[1], [0], [0], [1], [0, 0, 1, 1], [], []>} : vector<8x64xf32>, vector<64x4xf32>, vector<8x4xf32> -> vector<8x4xf32>
    %c0_128 = arith.constant 0 : index
    %c0_129 = arith.constant 0 : index
    %580 = vector.load %arg9[%c0_128, %c0_129] : memref<1x4xf32, #tpu.memory_space<vmem>>, vector<1x4xf32>
    %581 = vector.broadcast %580 : vector<1x4xf32> to vector<8x4xf32>
    %582 = arith.addf %579, %581 : vector<8x4xf32>
    %c0_130 = arith.constant 0 : index
    %c0_131 = arith.constant 0 : index
    %583 = vector.load %arg10[%c0_130, %c0_131] : memref<8x4xf32, #tpu.memory_space<vmem>>, vector<8x4xf32>
    tpu.vector_store %arg10[%c0_130, %c0_131], %582 {strides = array<i32>} : memref<8x4xf32, #tpu.memory_space<vmem>>, vector<8x4xf32>,
    return
  }
}

</mosaic_0001>

<llo_original>
// kernel: bilstm_reg_forward.1
$region0: #{bilstm_reg_forward.1}
  #allocation0 [shape = 'u32[]', space=smem, size = 0x4, offset = 0x4, fixed_abs, tag = 'smem constant byte address 0x4 - core index']
  #allocation1 [shape = 'u32[144,128]{1,0:T(1,128)}', space=vmem, size = 0x12000, scoped, tag = 'internal scratch']
  #allocation2 [shape = 'f32[64,256]{1,0:T(8,128)}', space=vmem, size = 0x10000, scoped, tag = 'scratch operand']
  %s0 = inlined_call_operand.vmem [shape: f32[64,32], index: 0, kind: input, shape index: {}]
  %s1 = inlined_call_operand.vmem [shape: s32[8,1], index: 1, kind: input, shape index: {}]
  %s2 = inlined_call_operand.vmem [shape: f32[32,256], index: 2, kind: input, shape index: {}]
  %s3 = inlined_call_operand.vmem [shape: f32[1,256], index: 3, kind: input, shape index: {}]
  %s4 = inlined_call_operand.vmem [shape: f32[32,128], index: 4, kind: input, shape index: {}]
  %s5 = inlined_call_operand.vmem [shape: f32[32,128], index: 5, kind: input, shape index: {}]
  %s6 = inlined_call_operand.vmem [shape: f32[64,64], index: 6, kind: input, shape index: {}]
  %s7 = inlined_call_operand.vmem [shape: f32[1,64], index: 7, kind: input, shape index: {}]
  %s8 = inlined_call_operand.vmem [shape: f32[64,4], index: 8, kind: input, shape index: {}]
  %s9 = inlined_call_operand.vmem [shape: f32[1,4], index: 9, kind: input, shape index: {}]
  %s10 = inlined_call_operand.vmem [shape: f32[8,4], index: 10, kind: output, shape index: {}]
  %s11 = sld [smem:[#allocation0]]
  $region50: #{bilstm_reg_forward.1} parent=0
    _
  %s13 = ssub.s32 1, %s11
  %s14 = scalar_select 0, %s13, %s11
  // Predicated region
  $region2: #{bilstm_reg_forward.1} parent=0 // pred_check
    _
  $region3: #{bilstm_reg_forward.1} parent=0 // pred_check_branch
    %16 = sbr.rel (0) target = $region5
  $region4: #{bilstm_reg_forward.1} parent=0 // pred_region
    _
  $region5: #{bilstm_reg_forward.1} parent=0 // pred_fallthru
    _
  // Predicated region
  $region6: #{bilstm_reg_forward.1} parent=0 // pred_check
    _
  $region7: #{bilstm_reg_forward.1} parent=0 // pred_check_branch
    %18 = sbr.rel (0) target = $region9
  $region8: #{bilstm_reg_forward.1} parent=0 // pred_region
    _
  $region9: #{bilstm_reg_forward.1} parent=0 // pred_fallthru
    _
  // Predicated region
  $region10: #{bilstm_reg_forward.1} parent=0 // pred_check
    _
  $region11: #{bilstm_reg_forward.1} parent=0 // pred_check_branch
    %20 = sbr.rel (0) target = $region13
  $region12: #{bilstm_reg_forward.1} parent=0 // pred_region
    _
  $region13: #{bilstm_reg_forward.1} parent=0 // pred_fallthru
    _
  // Predicated region
  $region14: #{bilstm_reg_forward.1} parent=0 // pred_check
    _
  $region15: #{bilstm_reg_forward.1} parent=0 // pred_check_branch
    %22 = sbr.rel (0) target = $region17
  $region16: #{bilstm_reg_forward.1} parent=0 // pred_region
    _
  $region17: #{bilstm_reg_forward.1} parent=0 // pred_fallthru
    _
  // Predicated region
  $region18: #{bilstm_reg_forward.1} parent=0 // pred_check
    _
  $region19: #{bilstm_reg_forward.1} parent=0 // pred_check_branch
    %24 = sbr.rel (0) target = $region21
  $region20: #{bilstm_reg_forward.1} parent=0 // pred_region
    _
  $region21: #{bilstm_reg_forward.1} parent=0 // pred_fallthru
    _
  // Predicated region
  $region22: #{bilstm_reg_forward.1} parent=0 // pred_check
    _
  $region23: #{bilstm_reg_forward.1} parent=0 // pred_check_branch
    %26 = sbr.rel (0) target = $region25
  $region24: #{bilstm_reg_forward.1} parent=0 // pred_region
    _
  $region25: #{bilstm_reg_forward.1} parent=0 // pred_fallthru
    _
  // Predicated region
  $region26: #{bilstm_reg_forward.1} parent=0 // pred_check
    _
  $region27: #{bilstm_reg_forward.1} parent=0 // pred_check_branch
    %28 = sbr.rel (0) target = $region29
  $region28: #{bilstm_reg_forward.1} parent=0 // pred_region
    _
  $region29: #{bilstm_reg_forward.1} parent=0 // pred_fallthru
    _
  // Predicated region
  $region30: #{bilstm_reg_forward.1} parent=0 // pred_check
    _
  $region31: #{bilstm_reg_forward.1} parent=0 // pred_check_branch
    %30 = sbr.rel (0) target = $region33
  $region32: #{bilstm_reg_forward.1} parent=0 // pred_region
    _
  $region33: #{bilstm_reg_forward.1} parent=0 // pred_fallthru
    _
  // Predicated region
  $region34: #{bilstm_reg_forward.1} parent=0 // pred_check
    _
  $region35: #{bilstm_reg_forward.1} parent=0 // pred_check_branch
    %32 = sbr.rel (0) target = $region37
  $region36: #{bilstm_reg_forward.1} parent=0 // pred_region
    _
  $region37: #{bilstm_reg_forward.1} parent=0 // pred_fallthru
    _
  // Predicated region
  $region38: #{bilstm_reg_forward.1} parent=0 // pred_check
    _
  $region39: #{bilstm_reg_forward.1} parent=0 // pred_check_branch
    %34 = sbr.rel (0) target = $region41
  $region40: #{bilstm_reg_forward.1} parent=0 // pred_region
    _
  $region41: #{bilstm_reg_forward.1} parent=0 // pred_fallthru
    _
  %v35 = vld [vmem:[%s0] sm:$0xff]
  %v36 = vld [vmem:[%s0 + $0x8] sm:$0xff]
  %v37 = vld [vmem:[%s0 + $0x10] sm:$0xff]
  %v38 = vld [vmem:[%s0 + $0x18] sm:$0xff]
  %v39 = vld [vmem:[%s0 + $0x20] sm:$0xff]
  %v40 = vld [vmem:[%s0 + $0x28] sm:$0xff]
  %v41 = vld [vmem:[%s0 + $0x30] sm:$0xff]
  %v42 = vld [vmem:[%s0 + $0x38] sm:$0xff]
  %v43 = vld [vmem:[%s1] sm:$0xff]
  %v44 = vld [vmem:[%s2] sm:$0xff]
  %v45 = vld [vmem:[%s2 + $0x8] sm:$0xff]
  %v46 = vld [vmem:[%s2 + $0x10] sm:$0xff]
  %v47 = vld [vmem:[%s2 + $0x18] sm:$0xff]
  %v48 = vld [vmem:[%s2 + $0x20] sm:$0xff]
  %v49 = vld [vmem:[%s2 + $0x28] sm:$0xff]
  %v50 = vld [vmem:[%s2 + $0x30] sm:$0xff]
  %v51 = vld [vmem:[%s2 + $0x38] sm:$0xff]
  %v52 = vld [vmem:[%s3] sm:$0x3]
  %v54 = vlaneseq
  %v55 = vshrl.u32 %v54, 7
  %v56 = vsub.s32 0, %v55
  %v57 = vrot.slane %v52, %v56
  %v58 = vlaneseq
  %v59 = vshrl.u32 %v58, 7
  %v60 = vsub.s32 1, %v59
  %v61 = vrot.slane %v52, %v60
  %vm64 = vcmask 261120
  %v66 = vsel %vm64, %v35, 0
  %v69 = vsel %vm64, %v36, 0
  %v72 = vsel %vm64, %v37, 0
  %v75 = vsel %vm64, %v38, 0
  %v78 = vsel %vm64, %v39, 0
  %v81 = vsel %vm64, %v40, 0
  %v84 = vsel %vm64, %v41, 0
  %v87 = vsel %vm64, %v42, 0
  %89 = vmatprep.subr.mxu0 0.0
  %90 = vmatpush1.msra.mxu0 0.0
  %91 = vmatprep.subr.mxu0 0.0
  %92 = vmatpush1.msra.mxu0 0.0
  %93 = vmatprep.subr.mxu0 0.0
  %94 = vmatpush1.msra.mxu0 0.0
  %95 = vmatprep.subr.mxu0 0.0
  %96 = vmatpush1.msra.mxu0 0.0
  %97 = vmatprep.subr.mxu0 0.0
  %98 = vmatpush1.msra.mxu0 0.0
  %99 = vmatprep.subr.mxu0 0.0
  %100 = vmatpush1.msra.mxu0 0.0
  %101 = vmatprep.subr.mxu0 0.0
  %102 = vmatpush1.msra.mxu0 0.0
  %103 = vmatprep.subr.mxu0 0.0
  %104 = vmatpush1.msra.mxu0 0.0
  %105 = vmatprep.subr.mxu0 0.0
  %106 = vmatpush1.msra.mxu0 0.0
  %107 = vmatprep.subr.mxu0 0.0
  %108 = vmatpush1.msra.mxu0 0.0
  %109 = vmatprep.subr.mxu0 0.0
  %110 = vmatpush1.msra.mxu0 0.0
  %111 = vmatprep.subr.mxu0 0.0
  %112 = vmatpush1.msra.mxu0 0.0
  %113 = vmatprep.subr.mxu0 %v51
  %114 = vmatpush1.msra.mxu0 %v50
  %115 = vmatprep.subr.mxu0 %v49
  %116 = vmatpush1.msra.mxu0 %v48
  %117 = vmatprep.subr.mxu0 %v47
  %118 = vmatpush1.msra.mxu0 %v46
  %119 = vmatprep.subr.mxu0 %v45
  %120 = vmatpush1.msra.mxu0 %v44
  %121 = vmatprep.subr.mxu0 0.0
  %122 = vmatpush2.msra.mxu0 0.0
  %123 = vmatprep.subr.mxu0 0.0
  %124 = vmatpush2.msra.mxu0 0.0
  %125 = vmatprep.subr.mxu0 0.0
  %126 = vmatpush2.msra.mxu0 0.0
  %127 = vmatprep.subr.mxu0 0.0
  %128 = vmatpush2.msra.mxu0 0.0
  %129 = vmatprep.subr.mxu0 0.0
  %130 = vmatpush2.msra.mxu0 0.0
  %131 = vmatprep.subr.mxu0 0.0
  %132 = vmatpush2.msra.mxu0 0.0
  %133 = vmatprep.subr.mxu0 0.0
  %134 = vmatpush2.msra.mxu0 0.0
  %135 = vmatprep.subr.mxu0 0.0
  %136 = vmatpush2.msra.mxu0 0.0
  %137 = vmatprep.subr.mxu0 0.0
  %138 = vmatpush2.msra.mxu0 0.0
  %139 = vmatprep.subr.mxu0 0.0
  %140 = vmatpush2.msra.mxu0 0.0
  %141 = vmatprep.subr.mxu0 0.0
  %142 = vmatpush2.msra.mxu0 0.0
  %143 = vmatprep.subr.mxu0 0.0
  %144 = vmatpush2.msra.mxu0 0.0
  %145 = vmatprep.subr.mxu0 0.0
  %146 = vmatpush2.msra.mxu0 0.0
  %147 = vmatprep.subr.mxu0 0.0
  %148 = vmatpush2.msra.mxu0 0.0
  %149 = vmatprep.subr.mxu0 0.0
  %150 = vmatpush2.msra.mxu0 0.0
  %151 = vmatprep.subr.mxu0 0.0
  %152 = vmatpush2.msra.mxu0 0.0
  %153 = vmatprep.mubr.f32.mxu0 0.0
  %154 = vmatmul.mubr.f32.gmra.mxu0 %v66
  %v155 = vpop.f32.mrf.mxu0
  %v156 = vadd.f32 %v57, %v155
  %v157 = vpop.f32.mrf.mxu0
  %v158 = vadd.f32 %v61, %v157
  %159 = vmatprep.mubr.f32.mxu0 0.0
  %160 = vmatmul.mubr.f32.gmra.mxu0 %v69
  %v161 = vpop.f32.mrf.mxu0
  %v162 = vadd.f32 %v57, %v161
  %v163 = vpop.f32.mrf.mxu0
  %v164 = vadd.f32 %v61, %v163
  %165 = vmatprep.mubr.f32.mxu0 0.0
  %166 = vmatmul.mubr.f32.gmra.mxu0 %v72
  %v167 = vpop.f32.mrf.mxu0
  %v168 = vadd.f32 %v57, %v167
  %v169 = vpop.f32.mrf.mxu0
  %v170 = vadd.f32 %v61, %v169
  %171 = vmatprep.mubr.f32.mxu0 0.0
  %172 = vmatmul.mubr.f32.gmra.mxu0 %v75
  %v173 = vpop.f32.mrf.mxu0
  %v174 = vadd.f32 %v57, %v173
  %v175 = vpop.f32.mrf.mxu0
  %v176 = vadd.f32 %v61, %v175
  %177 = vmatprep.mubr.f32.mxu0 0.0
  %178 = vmatmul.mubr.f32.gmra.mxu0 %v78
  %v179 = vpop.f32.mrf.mxu0
  %v180 = vadd.f32 %v57, %v179
  %v181 = vpop.f32.mrf.mxu0
  %v182 = vadd.f32 %v61, %v181
  %183 = vmatprep.mubr.f32.mxu0 0.0
  %184 = vmatmul.mubr.f32.gmra.mxu0 %v81
  %v185 = vpop.f32.mrf.mxu0
  %v186 = vadd.f32 %v57, %v185
  %v187 = vpop.f32.mrf.mxu0
  %v188 = vadd.f32 %v61, %v187
  %189 = vmatprep.mubr.f32.mxu0 0.0
  %190 = vmatmul.mubr.f32.gmra.mxu0 %v84
  %v191 = vpop.f32.mrf.mxu0
  %v192 = vadd.f32 %v57, %v191
  %v193 = vpop.f32.mrf.mxu0
  %v194 = vadd.f32 %v61, %v193
  %195 = vmatprep.mubr.f32.mxu0 0.0
  %196 = vmatmul.mubr.f32.gmra.mxu0 %v87
  %v197 = vpop.f32.mrf.mxu0
  %v198 = vadd.f32 %v57, %v197
  %v199 = vpop.f32.mrf.mxu0
  %v200 = vadd.f32 %v61, %v199
  %201 = vdwg.mxu0
  %202 = vst [vmem:[#allocation2] sm:$0xff] %v156
  %203 = vst [vmem:[#allocation2 + $0x8] sm:$0xff] %v158
  %204 = vst [vmem:[#allocation2 + $0x10] sm:$0xff] %v162
  %205 = vst [vmem:[#allocation2 + $0x18] sm:$0xff] %v164
  %206 = vst [vmem:[#allocation2 + $0x20] sm:$0xff] %v168
  %207 = vst [vmem:[#allocation2 + $0x28] sm:$0xff] %v170
  %208 = vst [vmem:[#allocation2 + $0x30] sm:$0xff] %v174
  %209 = vst [vmem:[#allocation2 + $0x38] sm:$0xff] %v176
  %210 = vst [vmem:[#allocation2 + $0x40] sm:$0xff] %v180
  %211 = vst [vmem:[#allocation2 + $0x48] sm:$0xff] %v182
  %212 = vst [vmem:[#allocation2 + $0x50] sm:$0xff] %v186
  %213 = vst [vmem:[#allocation2 + $0x58] sm:$0xff] %v188
  %214 = vst [vmem:[#allocation2 + $0x60] sm:$0xff] %v192
  %215 = vst [vmem:[#allocation2 + $0x68] sm:$0xff] %v194
  %216 = vst [vmem:[#allocation2 + $0x70] sm:$0xff] %v198
  %217 = vst [vmem:[#allocation2 + $0x78] sm:$0xff] %v200
  %v218 = vld [vmem:[%s4] sm:$0xff]
  %v219 = vld [vmem:[%s4 + $0x8] sm:$0xff]
  %v220 = vld [vmem:[%s4 + $0x10] sm:$0xff]
  %v221 = vld [vmem:[%s4 + $0x18] sm:$0xff]
  %s222 = smul.u32 0, 2
  %s223 = smul.addr %s222, 8
  %s224 = scalar_lea.vmem [#allocation2], %s223
  %v225 = vld [vmem:[%s224] sm:$0xff]
  %v227 = vsel %vm64, 0.0, 0
  %229 = vmatprep.subr.mxu0 0.0
  %230 = vmatpush1.msra.mxu0 0.0
  %231 = vmatprep.subr.mxu0 0.0
  %232 = vmatpush1.msra.mxu0 0.0
  %233 = vmatprep.subr.mxu0 0.0
  %234 = vmatpush1.msra.mxu0 0.0
  %235 = vmatprep.subr.mxu0 0.0
  %236 = vmatpush1.msra.mxu0 0.0
  %237 = vmatprep.subr.mxu0 0.0
  %238 = vmatpush1.msra.mxu0 0.0
  %239 = vmatprep.subr.mxu0 0.0
  %240 = vmatpush1.msra.mxu0 0.0
  %241 = vmatprep.subr.mxu0 0.0
  %242 = vmatpush1.msra.mxu0 0.0
  %243 = vmatprep.subr.mxu0 0.0
  %244 = vmatpush1.msra.mxu0 0.0
  %245 = vmatprep.subr.mxu0 0.0
  %246 = vmatpush1.msra.mxu0 0.0
  %247 = vmatprep.subr.mxu0 0.0
  %248 = vmatpush1.msra.mxu0 0.0
  %249 = vmatprep.subr.mxu0 0.0
  %250 = vmatpush1.msra.mxu0 0.0
  %251 = vmatprep.subr.mxu0 0.0
  %252 = vmatpush1.msra.mxu0 0.0
  %253 = vmatprep.subr.mxu0 0.0
  %254 = vmatpush1.msra.mxu0 %v221
  %255 = vmatprep.subr.mxu0 0.0
  %256 = vmatpush1.msra.mxu0 %v220
  %257 = vmatprep.subr.mxu0 0.0
  %258 = vmatpush1.msra.mxu0 %v219
  %259 = vmatprep.subr.mxu0 0.0
  %260 = vmatpush1.msra.mxu0 %v218
  %261 = vmatprep.subr.mxu0 0.0
  %262 = vmatpush2.msra.mxu0 0.0
  %263 = vmatprep.subr.mxu0 0.0
  %264 = vmatpush2.msra.mxu0 0.0
  %265 = vmatprep.subr.mxu0 0.0
  %266 = vmatpush2.msra.mxu0 0.0
  %267 = vmatprep.subr.mxu0 0.0
  %268 = vmatpush2.msra.mxu0 0.0
  %269 = vmatprep.subr.mxu0 0.0
  %270 = vmatpush2.msra.mxu0 0.0
  %271 = vmatprep.subr.mxu0 0.0
  %272 = vmatpush2.msra.mxu0 0.0
  %273 = vmatprep.subr.mxu0 0.0
  %274 = vmatpush2.msra.mxu0 0.0
  %275 = vmatprep.subr.mxu0 0.0
  %276 = vmatpush2.msra.mxu0 0.0
  %277 = vmatprep.subr.mxu0 0.0
  %278 = vmatpush2.msra.mxu0 0.0
  %279 = vmatprep.subr.mxu0 0.0
  %280 = vmatpush2.msra.mxu0 0.0
  %281 = vmatprep.subr.mxu0 0.0
  %282 = vmatpush2.msra.mxu0 0.0
  %283 = vmatprep.subr.mxu0 0.0
  %284 = vmatpush2.msra.mxu0 0.0
  %285 = vmatprep.subr.mxu0 0.0
  %286 = vmatpush2.msra.mxu0 0.0
  %287 = vmatprep.subr.mxu0 0.0
  %288 = vmatpush2.msra.mxu0 0.0
  %289 = vmatprep.subr.mxu0 0.0
  %290 = vmatpush2.msra.mxu0 0.0
  %291 = vmatprep.subr.mxu0 0.0
  %292 = vmatpush2.msra.mxu0 0.0
  %293 = vmatprep.mubr.f32.mxu0 0.0
  %294 = vmatmul.mubr.f32.gmra.mxu0 %v227
  %v295 = vpop.f32.mrf.mxu0
  %v296 = vadd.f32 0.0, %v295
  %v297 = vpop.f32.mrf.mxu0
  %298 = vdwg.mxu0
  %v299 = vadd.f32 %v225, %v296
  %v300 = vxor.u32 %v299, 2147483648
  %v301 = vmul.f32 %v300, 1.442695
  %v302 = vpow.pop %v301
  %v303 = vadd.f32 %v302, 1.0
  %v304 = vrcp.pop %v303
  %v305 = vmul.f32 1.0, %v304
  %v306 = vtanh.pop %v299
  %v307 = vmul.f32 %v305, 0.0
  %309 = vrot.lane.b32.xlu0 %v306, 64
  %v310 = vpop.permute.xlu0 %309
  %v312 = vmul.f32 %v305, %v310
  %314 = vrot.lane.b32.xlu0 %v312, 32
  %v315 = vpop.permute.xlu0 %314
  %v317 = vadd.f32 %v307, %v315
  %v318 = vtanh.pop %v317
  %320 = vrot.lane.b32.xlu0 %v318, 64
  %v321 = vpop.permute.xlu0 %320
  %v323 = vmul.f32 %v305, %v321
  %vm324 = vcmp.gt.s32.totalorder %v43, 0
  %v325 = vsel %vm324, 1, 0
  %326 = vset.pattern.permute.xlu0 0
  %327 = vperm.xlu0 %326, %v325
  %v328 = vpop.permute.xlu0 %327
  %vm329 = vcmp.eq.s32.totalorder %v328, 1
  %v330 = vsel %vm329, %v317, 0.0
  %v331 = vsel %vm329, %v323, 0.0
  %vm332 = vcmp.eq.f32.partialorder %v323, 0.0
  %v333 = vsel %vm332, -1e+08, %v323
  %v334 = vsel %vm329, %v333, -1e+08
  %v335 = vmax.f32 %v334, -1e+08
  %s336 = smul.u32 1, 2
  %s337 = smul.addr %s336, 8
  %s338 = scalar_lea.vmem [#allocation2], %s337
  %v339 = vld [vmem:[%s338] sm:$0xff]
  %341 = vrot.lane.b32.xlu0 %v331, 32
  %v342 = vpop.permute.xlu0 %341
  %v343 = vsel %vm64, %v342, 0
  %345 = vmatprep.subr.mxu0 0.0
  %346 = vmatpush1.msra.mxu0 0.0
  %347 = vmatprep.subr.mxu0 0.0
  %348 = vmatpush1.msra.mxu0 0.0
  %349 = vmatprep.subr.mxu0 0.0
  %350 = vmatpush1.msra.mxu0 0.0
  %351 = vmatprep.subr.mxu0 0.0
  %352 = vmatpush1.msra.mxu0 0.0
  %353 = vmatprep.subr.mxu0 0.0
  %354 = vmatpush1.msra.mxu0 0.0
  %355 = vmatprep.subr.mxu0 0.0
  %356 = vmatpush1.msra.mxu0 0.0
  %357 = vmatprep.subr.mxu0 0.0
  %358 = vmatpush1.msra.mxu0 0.0
  %359 = vmatprep.subr.mxu0 0.0
  %360 = vmatpush1.msra.mxu0 0.0
  %361 = vmatprep.subr.mxu0 0.0
  %362 = vmatpush1.msra.mxu0 0.0
  %363 = vmatprep.subr.mxu0 0.0
  %364 = vmatpush1.msra.mxu0 0.0
  %365 = vmatprep.subr.mxu0 0.0
  %366 = vmatpush1.msra.mxu0 0.0
  %367 = vmatprep.subr.mxu0 0.0
  %368 = vmatpush1.msra.mxu0 0.0
  %369 = vmatprep.subr.mxu0 0.0
  %370 = vmatpush1.msra.mxu0 %v221
  %371 = vmatprep.subr.mxu0 0.0
  %372 = vmatpush1.msra.mxu0 %v220
  %373 = vmatprep.subr.mxu0 0.0
  %374 = vmatpush1.msra.mxu0 %v219
  %375 = vmatprep.subr.mxu0 0.0
  %376 = vmatpush1.msra.mxu0 %v218
  %377 = vmatprep.subr.mxu0 0.0
  %378 = vmatpush2.msra.mxu0 0.0
  %379 = vmatprep.subr.mxu0 0.0
  %380 = vmatpush2.msra.mxu0 0.0
  %381 = vmatprep.subr.mxu0 0.0
  %382 = vmatpush2.msra.mxu0 0.0
  %383 = vmatprep.subr.mxu0 0.0
  %384 = vmatpush2.msra.mxu0 0.0
  %385 = vmatprep.subr.mxu0 0.0
  %386 = vmatpush2.msra.mxu0 0.0
  %387 = vmatprep.subr.mxu0 0.0
  %388 = vmatpush2.msra.mxu0 0.0
  %389 = vmatprep.subr.mxu0 0.0
  %390 = vmatpush2.msra.mxu0 0.0
  %391 = vmatprep.subr.mxu0 0.0
  %392 = vmatpush2.msra.mxu0 0.0
  %393 = vmatprep.subr.mxu0 0.0
  %394 = vmatpush2.msra.mxu0 0.0
  %395 = vmatprep.subr.mxu0 0.0
  %396 = vmatpush2.msra.mxu0 0.0
  %397 = vmatprep.subr.mxu0 0.0
  %398 = vmatpush2.msra.mxu0 0.0
  %399 = vmatprep.subr.mxu0 0.0
  %400 = vmatpush2.msra.mxu0 0.0
  %401 = vmatprep.subr.mxu0 0.0
  %402 = vmatpush2.msra.mxu0 0.0
  %403 = vmatprep.subr.mxu0 0.0
  %404 = vmatpush2.msra.mxu0 0.0
  %405 = vmatprep.subr.mxu0 0.0
  %406 = vmatpush2.msra.mxu0 0.0
  %407 = vmatprep.subr.mxu0 0.0
  %408 = vmatpush2.msra.mxu0 0.0
  %409 = vmatprep.mubr.f32.mxu0 0.0
  %410 = vmatmul.mubr.f32.gmra.mxu0 %v343
  %v411 = vpop.f32.mrf.mxu0
  %v412 = vadd.f32 0.0, %v411
  %v413 = vpop.f32.mrf.mxu0
  %414 = vdwg.mxu0
  %v415 = vadd.f32 %v339, %v412
  %v416 = vxor.u32 %v415, 2147483648
  %v417 = vmul.f32 %v416, 1.442695
  %v418 = vpow.pop %v417
  %v419 = vadd.f32 %v418, 1.0
  %v420 = vrcp.pop %v419
  %v421 = vmul.f32 1.0, %v420
  %v422 = vtanh.pop %v415
  %v423 = vmul.f32 %v421, %v330
  %425 = vrot.lane.b32.xlu0 %v422, 64
  %v426 = vpop.permute.xlu0 %425
  %v428 = vmul.f32 %v421, %v426
  %430 = vrot.lane.b32.xlu0 %v428, 32
  %v431 = vpop.permute.xlu0 %430
  %v433 = vadd.f32 %v423, %v431
  %v434 = vtanh.pop %v433
  %436 = vrot.lane.b32.xlu0 %v434, 64
  %v437 = vpop.permute.xlu0 %436
  %v439 = vmul.f32 %v421, %v437
  %vm440 = vcmp.gt.s32.totalorder %v43, 1
  %v441 = vsel %vm440, 1, 0
  %442 = vset.pattern.permute.xlu0 0
  %443 = vperm.xlu0 %442, %v441
  %v444 = vpop.permute.xlu0 %443
  %vm445 = vcmp.eq.s32.totalorder %v444, 1
  %v446 = vsel %vm445, %v433, %v330
  %v447 = vsel %vm445, %v439, %v331
  %vm448 = vcmp.eq.f32.partialorder %v439, 0.0
  %v449 = vsel %vm448, -1e+08, %v439
  %v450 = vsel %vm445, %v449, -1e+08
  %v451 = vmax.f32 %v335, %v450
  %s452 = smul.u32 2, 2
  %s453 = smul.addr %s452, 8
  %s454 = scalar_lea.vmem [#allocation2], %s453
  %v455 = vld [vmem:[%s454] sm:$0xff]
  %457 = vrot.lane.b32.xlu0 %v447, 32
  %v458 = vpop.permute.xlu0 %457
  %v459 = vsel %vm64, %v458, 0
  %461 = vmatprep.subr.mxu0 0.0
  %462 = vmatpush1.msra.mxu0 0.0
  %463 = vmatprep.subr.mxu0 0.0
  %464 = vmatpush1.msra.mxu0 0.0
  %465 = vmatprep.subr.mxu0 0.0
  %466 = vmatpush1.msra.mxu0 0.0
  %467 = vmatprep.subr.mxu0 0.0
  %468 = vmatpush1.msra.mxu0 0.0
  %469 = vmatprep.subr.mxu0 0.0
  %470 = vmatpush1.msra.mxu0 0.0
  %471 = vmatprep.subr.mxu0 0.0
  %472 = vmatpush1.msra.mxu0 0.0
  %473 = vmatprep.subr.mxu0 0.0
  %474 = vmatpush1.msra.mxu0 0.0
  %475 = vmatprep.subr.mxu0 0.0
  %476 = vmatpush1.msra.mxu0 0.0
  %477 = vmatprep.subr.mxu0 0.0
  %478 = vmatpush1.msra.mxu0 0.0
  %479 = vmatprep.subr.mxu0 0.0
  %480 = vmatpush1.msra.mxu0 0.0
  %481 = vmatprep.subr.mxu0 0.0
  %482 = vmatpush1.msra.mxu0 0.0
  %483 = vmatprep.subr.mxu0 0.0
  %484 = vmatpush1.msra.mxu0 0.0
  %485 = vmatprep.subr.mxu0 0.0
  %486 = vmatpush1.msra.mxu0 %v221
  %487 = vmatprep.subr.mxu0 0.0
  %488 = vmatpush1.msra.mxu0 %v220
  %489 = vmatprep.subr.mxu0 0.0
  %490 = vmatpush1.msra.mxu0 %v219
  %491 = vmatprep.subr.mxu0 0.0
  %492 = vmatpush1.msra.mxu0 %v218
  %493 = vmatprep.subr.mxu0 0.0
  %494 = vmatpush2.msra.mxu0 0.0
  %495 = vmatprep.subr.mxu0 0.0
  %496 = vmatpush2.msra.mxu0 0.0
  %497 = vmatprep.subr.mxu0 0.0
  %498 = vmatpush2.msra.mxu0 0.0
  %499 = vmatprep.subr.mxu0 0.0
  %500 = vmatpush2.msra.mxu0 0.0
  %501 = vmatprep.subr.mxu0 0.0
  %502 = vmatpush2.msra.mxu0 0.0
  %503 = vmatprep.subr.mxu0 0.0
  %504 = vmatpush2.msra.mxu0 0.0
  %505 = vmatprep.subr.mxu0 0.0
  %506 = vmatpush2.msra.mxu0 0.0
  %507 = vmatprep.subr.mxu0 0.0
  %508 = vmatpush2.msra.mxu0 0.0
  %509 = vmatprep.subr.mxu0 0.0
  %510 = vmatpush2.msra.mxu0 0.0
  %511 = vmatprep.subr.mxu0 0.0
  %512 = vmatpush2.msra.mxu0 0.0
  %513 = vmatprep.subr.mxu0 0.0
  %514 = vmatpush2.msra.mxu0 0.0
  %515 = vmatprep.subr.mxu0 0.0
  %516 = vmatpush2.msra.mxu0 0.0
  %517 = vmatprep.subr.mxu0 0.0
  %518 = vmatpush2.msra.mxu0 0.0
  %519 = vmatprep.subr.mxu0 0.0
  %520 = vmatpush2.msra.mxu0 0.0
  %521 = vmatprep.subr.mxu0 0.0
  %522 = vmatpush2.msra.mxu0 0.0
  %523 = vmatprep.subr.mxu0 0.0
  %524 = vmatpush2.msra.mxu0 0.0
  %525 = vmatprep.mubr.f32.mxu0 0.0
  %526 = vmatmul.mubr.f32.gmra.mxu0 %v459
  %v527 = vpop.f32.mrf.mxu0
  %v528 = vadd.f32 0.0, %v527
  %v529 = vpop.f32.mrf.mxu0
  %530 = vdwg.mxu0
  %v531 = vadd.f32 %v455, %v528
  %v532 = vxor.u32 %v531, 2147483648
  %v533 = vmul.f32 %v532, 1.442695
  %v534 = vpow.pop %v533
  %v535 = vadd.f32 %v534, 1.0
  %v536 = vrcp.pop %v535
  %v537 = vmul.f32 1.0, %v536
  %v538 = vtanh.pop %v531
  %v539 = vmul.f32 %v537, %v446
  %541 = vrot.lane.b32.xlu0 %v538, 64
  %v542 = vpop.permute.xlu0 %541
  %v544 = vmul.f32 %v537, %v542
  %546 = vrot.lane.b32.xlu0 %v544, 32
  %v547 = vpop.permute.xlu0 %546
  %v549 = vadd.f32 %v539, %v547
  %v550 = vtanh.pop %v549
  %552 = vrot.lane.b32.xlu0 %v550, 64
  %v553 = vpop.permute.xlu0 %552
  %v555 = vmul.f32 %v537, %v553
  %vm556 = vcmp.gt.s32.totalorder %v43, 2
  %v557 = vsel %vm556, 1, 0
  %558 = vset.pattern.permute.xlu0 0
  %559 = vperm.xlu0 %558, %v557
  %v560 = vpop.permute.xlu0 %559
  %vm561 = vcmp.eq.s32.totalorder %v560, 1
  %v562 = vsel %vm561, %v549, %v446
  %v563 = vsel %vm561, %v555, %v447
  %vm564 = vcmp.eq.f32.partialorder %v555, 0.0
  %v565 = vsel %vm564, -1e+08, %v555
  %v566 = vsel %vm561, %v565, -1e+08
  %v567 = vmax.f32 %v451, %v566
  %s568 = smul.u32 3, 2
  %s569 = smul.addr %s568, 8
  %s570 = scalar_lea.vmem [#allocation2], %s569
  %v571 = vld [vmem:[%s570] sm:$0xff]
  %573 = vrot.lane.b32.xlu0 %v563, 32
  %v574 = vpop.permute.xlu0 %573
  %v575 = vsel %vm64, %v574, 0
  %577 = vmatprep.subr.mxu0 0.0
  %578 = vmatpush1.msra.mxu0 0.0
  %579 = vmatprep.subr.mxu0 0.0
  %580 = vmatpush1.msra.mxu0 0.0
  %581 = vmatprep.subr.mxu0 0.0
  %582 = vmatpush1.msra.mxu0 0.0
  %583 = vmatprep.subr.mxu0 0.0
  %584 = vmatpush1.msra.mxu0 0.0
  %585 = vmatprep.subr.mxu0 0.0
  %586 = vmatpush1.msra.mxu0 0.0
  %587 = vmatprep.subr.mxu0 0.0
  %588 = vmatpush1.msra.mxu0 0.0
  %589 = vmatprep.subr.mxu0 0.0
  %590 = vmatpush1.msra.mxu0 0.0
  %591 = vmatprep.subr.mxu0 0.0
  %592 = vmatpush1.msra.mxu0 0.0
  %593 = vmatprep.subr.mxu0 0.0
  %594 = vmatpush1.msra.mxu0 0.0
  %595 = vmatprep.subr.mxu0 0.0
  %596 = vmatpush1.msra.mxu0 0.0
  %597 = vmatprep.subr.mxu0 0.0
  %598 = vmatpush1.msra.mxu0 0.0
  %599 = vmatprep.subr.mxu0 0.0
  %600 = vmatpush1.msra.mxu0 0.0
  %601 = vmatprep.subr.mxu0 0.0
  %602 = vmatpush1.msra.mxu0 %v221
  %603 = vmatprep.subr.mxu0 0.0
  %604 = vmatpush1.msra.mxu0 %v220
  %605 = vmatprep.subr.mxu0 0.0
  %606 = vmatpush1.msra.mxu0 %v219
  %607 = vmatprep.subr.mxu0 0.0
  %608 = vmatpush1.msra.mxu0 %v218
  %609 = vmatprep.subr.mxu0 0.0
  %610 = vmatpush2.msra.mxu0 0.0
  %611 = vmatprep.subr.mxu0 0.0
  %612 = vmatpush2.msra.mxu0 0.0
  %613 = vmatprep.subr.mxu0 0.0
  %614 = vmatpush2.msra.mxu0 0.0
  %615 = vmatprep.subr.mxu0 0.0
  %616 = vmatpush2.msra.mxu0 0.0
  %617 = vmatprep.subr.mxu0 0.0
  %618 = vmatpush2.msra.mxu0 0.0
  %619 = vmatprep.subr.mxu0 0.0
  %620 = vmatpush2.msra.mxu0 0.0
  %621 = vmatprep.subr.mxu0 0.0
  %622 = vmatpush2.msra.mxu0 0.0
  %623 = vmatprep.subr.mxu0 0.0
  %624 = vmatpush2.msra.mxu0 0.0
  %625 = vmatprep.subr.mxu0 0.0
  %626 = vmatpush2.msra.mxu0 0.0
  %627 = vmatprep.subr.mxu0 0.0
  %628 = vmatpush2.msra.mxu0 0.0
  %629 = vmatprep.subr.mxu0 0.0
  %630 = vmatpush2.msra.mxu0 0.0
  %631 = vmatprep.subr.mxu0 0.0
  %632 = vmatpush2.msra.mxu0 0.0
  %633 = vmatprep.subr.mxu0 0.0
  %634 = vmatpush2.msra.mxu0 0.0
  %635 = vmatprep.subr.mxu0 0.0
  %636 = vmatpush2.msra.mxu0 0.0
  %637 = vmatprep.subr.mxu0 0.0
  %638 = vmatpush2.msra.mxu0 0.0
  %639 = vmatprep.subr.mxu0 0.0
  %640 = vmatpush2.msra.mxu0 0.0
  %641 = vmatprep.mubr.f32.mxu0 0.0
  %642 = vmatmul.mubr.f32.gmra.mxu0 %v575
  %v643 = vpop.f32.mrf.mxu0
  %v644 = vadd.f32 0.0, %v643
  %v645 = vpop.f32.mrf.mxu0
  %646 = vdwg.mxu0
  %v647 = vadd.f32 %v571, %v644
  %v648 = vxor.u32 %v647, 2147483648
  %v649 = vmul.f32 %v648, 1.442695
  %v650 = vpow.pop %v649
  %v651 = vadd.f32 %v650, 1.0
  %v652 = vrcp.pop %v651
  %v653 = vmul.f32 1.0, %v652
  %v654 = vtanh.pop %v647
  %v655 = vmul.f32 %v653, %v562
  %657 = vrot.lane.b32.xlu0 %v654, 64
  %v658 = vpop.permute.xlu0 %657
  %v660 = vmul.f32 %v653, %v658
  %662 = vrot.lane.b32.xlu0 %v660, 32
  %v663 = vpop.permute.xlu0 %662
  %v665 = vadd.f32 %v655, %v663
  %v666 = vtanh.pop %v665
  %668 = vrot.lane.b32.xlu0 %v666, 64
  %v669 = vpop.permute.xlu0 %668
  %v671 = vmul.f32 %v653, %v669
  %vm672 = vcmp.gt.s32.totalorder %v43, 3
  %v673 = vsel %vm672, 1, 0
  %674 = vset.pattern.permute.xlu0 0
  %675 = vperm.xlu0 %674, %v673
  %v676 = vpop.permute.xlu0 %675
  %vm677 = vcmp.eq.s32.totalorder %v676, 1
  %v678 = vsel %vm677, %v665, %v562
  %v679 = vsel %vm677, %v671, %v563
  %vm680 = vcmp.eq.f32.partialorder %v671, 0.0
  %v681 = vsel %vm680, -1e+08, %v671
  %v682 = vsel %vm677, %v681, -1e+08
  %v683 = vmax.f32 %v567, %v682
  %s684 = smul.u32 4, 2
  %s685 = smul.addr %s684, 8
  %s686 = scalar_lea.vmem [#allocation2], %s685
  %v687 = vld [vmem:[%s686] sm:$0xff]
  %689 = vrot.lane.b32.xlu0 %v679, 32
  %v690 = vpop.permute.xlu0 %689
  %v691 = vsel %vm64, %v690, 0
  %693 = vmatprep.subr.mxu0 0.0
  %694 = vmatpush1.msra.mxu0 0.0
  %695 = vmatprep.subr.mxu0 0.0
  %696 = vmatpush1.msra.mxu0 0.0
  %697 = vmatprep.subr.mxu0 0.0
  %698 = vmatpush1.msra.mxu0 0.0
  %699 = vmatprep.subr.mxu0 0.0
  %700 = vmatpush1.msra.mxu0 0.0
  %701 = vmatprep.subr.mxu0 0.0
  %702 = vmatpush1.msra.mxu0 0.0
  %703 = vmatprep.subr.mxu0 0.0
  %704 = vmatpush1.msra.mxu0 0.0
  %705 = vmatprep.subr.mxu0 0.0
  %706 = vmatpush1.msra.mxu0 0.0
  %707 = vmatprep.subr.mxu0 0.0
  %708 = vmatpush1.msra.mxu0 0.0
  %709 = vmatprep.subr.mxu0 0.0
  %710 = vmatpush1.msra.mxu0 0.0
  %711 = vmatprep.subr.mxu0 0.0
  %712 = vmatpush1.msra.mxu0 0.0
  %713 = vmatprep.subr.mxu0 0.0
  %714 = vmatpush1.msra.mxu0 0.0
  %715 = vmatprep.subr.mxu0 0.0
  %716 = vmatpush1.msra.mxu0 0.0
  %717 = vmatprep.subr.mxu0 0.0
  %718 = vmatpush1.msra.mxu0 %v221
  %719 = vmatprep.subr.mxu0 0.0
  %720 = vmatpush1.msra.mxu0 %v220
  %721 = vmatprep.subr.mxu0 0.0
  %722 = vmatpush1.msra.mxu0 %v219
  %723 = vmatprep.subr.mxu0 0.0
  %724 = vmatpush1.msra.mxu0 %v218
  %725 = vmatprep.subr.mxu0 0.0
  %726 = vmatpush2.msra.mxu0 0.0
  %727 = vmatprep.subr.mxu0 0.0
  %728 = vmatpush2.msra.mxu0 0.0
  %729 = vmatprep.subr.mxu0 0.0
  %730 = vmatpush2.msra.mxu0 0.0
  %731 = vmatprep.subr.mxu0 0.0
  %732 = vmatpush2.msra.mxu0 0.0
  %733 = vmatprep.subr.mxu0 0.0
  %734 = vmatpush2.msra.mxu0 0.0
  %735 = vmatprep.subr.mxu0 0.0
  %736 = vmatpush2.msra.mxu0 0.0
  %737 = vmatprep.subr.mxu0 0.0
  %738 = vmatpush2.msra.mxu0 0.0
  %739 = vmatprep.subr.mxu0 0.0
  %740 = vmatpush2.msra.mxu0 0.0
  %741 = vmatprep.subr.mxu0 0.0
  %742 = vmatpush2.msra.mxu0 0.0
  %743 = vmatprep.subr.mxu0 0.0
  %744 = vmatpush2.msra.mxu0 0.0
  %745 = vmatprep.subr.mxu0 0.0
  %746 = vmatpush2.msra.mxu0 0.0
  %747 = vmatprep.subr.mxu0 0.0
  %748 = vmatpush2.msra.mxu0 0.0
  %749 = vmatprep.subr.mxu0 0.0
  %750 = vmatpush2.msra.mxu0 0.0
  %751 = vmatprep.subr.mxu0 0.0
  %752 = vmatpush2.msra.mxu0 0.0
  %753 = vmatprep.subr.mxu0 0.0
  %754 = vmatpush2.msra.mxu0 0.0
  %755 = vmatprep.subr.mxu0 0.0
  %756 = vmatpush2.msra.mxu0 0.0
  %757 = vmatprep.mubr.f32.mxu0 0.0
  %758 = vmatmul.mubr.f32.gmra.mxu0 %v691
  %v759 = vpop.f32.mrf.mxu0
  %v760 = vadd.f32 0.0, %v759
  %v761 = vpop.f32.mrf.mxu0
  %762 = vdwg.mxu0
  %v763 = vadd.f32 %v687, %v760
  %v764 = vxor.u32 %v763, 2147483648
  %v765 = vmul.f32 %v764, 1.442695
  %v766 = vpow.pop %v765
  %v767 = vadd.f32 %v766, 1.0
  %v768 = vrcp.pop %v767
  %v769 = vmul.f32 1.0, %v768
  %v770 = vtanh.pop %v763
  %v771 = vmul.f32 %v769, %v678
  %773 = vrot.lane.b32.xlu0 %v770, 64
  %v774 = vpop.permute.xlu0 %773
  %v776 = vmul.f32 %v769, %v774
  %778 = vrot.lane.b32.xlu0 %v776, 32
  %v779 = vpop.permute.xlu0 %778
  %v781 = vadd.f32 %v771, %v779
  %v782 = vtanh.pop %v781
  %784 = vrot.lane.b32.xlu0 %v782, 64
  %v785 = vpop.permute.xlu0 %784
  %v787 = vmul.f32 %v769, %v785
  %vm788 = vcmp.gt.s32.totalorder %v43, 4
  %v789 = vsel %vm788, 1, 0
  %790 = vset.pattern.permute.xlu0 0
  %791 = vperm.xlu0 %790, %v789
  %v792 = vpop.permute.xlu0 %791
  %vm793 = vcmp.eq.s32.totalorder %v792, 1
  %v794 = vsel %vm793, %v781, %v678
  %v795 = vsel %vm793, %v787, %v679
  %vm796 = vcmp.eq.f32.partialorder %v787, 0.0
  %v797 = vsel %vm796, -1e+08, %v787
  %v798 = vsel %vm793, %v797, -1e+08
  %v799 = vmax.f32 %v683, %v798
  %s800 = smul.u32 5, 2
  %s801 = smul.addr %s800, 8
  %s802 = scalar_lea.vmem [#allocation2], %s801
  %v803 = vld [vmem:[%s802] sm:$0xff]
  %805 = vrot.lane.b32.xlu0 %v795, 32
  %v806 = vpop.permute.xlu0 %805
  %v807 = vsel %vm64, %v806, 0
  %809 = vmatprep.subr.mxu0 0.0
  %810 = vmatpush1.msra.mxu0 0.0
  %811 = vmatprep.subr.mxu0 0.0
  %812 = vmatpush1.msra.mxu0 0.0
  %813 = vmatprep.subr.mxu0 0.0
  %814 = vmatpush1.msra.mxu0 0.0
  %815 = vmatprep.subr.mxu0 0.0
  %816 = vmatpush1.msra.mxu0 0.0
  %817 = vmatprep.subr.mxu0 0.0
  %818 = vmatpush1.msra.mxu0 0.0
  %819 = vmatprep.subr.mxu0 0.0
  %820 = vmatpush1.msra.mxu0 0.0
  %821 = vmatprep.subr.mxu0 0.0
  %822 = vmatpush1.msra.mxu0 0.0
  %823 = vmatprep.subr.mxu0 0.0
  %824 = vmatpush1.msra.mxu0 0.0
  %825 = vmatprep.subr.mxu0 0.0
  %826 = vmatpush1.msra.mxu0 0.0
  %827 = vmatprep.subr.mxu0 0.0
  %828 = vmatpush1.msra.mxu0 0.0
  %829 = vmatprep.subr.mxu0 0.0
  %830 = vmatpush1.msra.mxu0 0.0
  %831 = vmatprep.subr.mxu0 0.0
  %832 = vmatpush1.msra.mxu0 0.0
  %833 = vmatprep.subr.mxu0 0.0
  %834 = vmatpush1.msra.mxu0 %v221
  %835 = vmatprep.subr.mxu0 0.0
  %836 = vmatpush1.msra.mxu0 %v220
  %837 = vmatprep.subr.mxu0 0.0
  %838 = vmatpush1.msra.mxu0 %v219
  %839 = vmatprep.subr.mxu0 0.0
  %840 = vmatpush1.msra.mxu0 %v218
  %841 = vmatprep.subr.mxu0 0.0
  %842 = vmatpush2.msra.mxu0 0.0
  %843 = vmatprep.subr.mxu0 0.0
  %844 = vmatpush2.msra.mxu0 0.0
  %845 = vmatprep.subr.mxu0 0.0
  %846 = vmatpush2.msra.mxu0 0.0
  %847 = vmatprep.subr.mxu0 0.0
  %848 = vmatpush2.msra.mxu0 0.0
  %849 = vmatprep.subr.mxu0 0.0
  %850 = vmatpush2.msra.mxu0 0.0
  %851 = vmatprep.subr.mxu0 0.0
  %852 = vmatpush2.msra.mxu0 0.0
  %853 = vmatprep.subr.mxu0 0.0
  %854 = vmatpush2.msra.mxu0 0.0
  %855 = vmatprep.subr.mxu0 0.0
  %856 = vmatpush2.msra.mxu0 0.0
  %857 = vmatprep.subr.mxu0 0.0
  %858 = vmatpush2.msra.mxu0 0.0
  %859 = vmatprep.subr.mxu0 0.0
  %860 = vmatpush2.msra.mxu0 0.0
  %861 = vmatprep.subr.mxu0 0.0
  %862 = vmatpush2.msra.mxu0 0.0
  %863 = vmatprep.subr.mxu0 0.0
  %864 = vmatpush2.msra.mxu0 0.0
  %865 = vmatprep.subr.mxu0 0.0
  %866 = vmatpush2.msra.mxu0 0.0
  %867 = vmatprep.subr.mxu0 0.0
  %868 = vmatpush2.msra.mxu0 0.0
  %869 = vmatprep.subr.mxu0 0.0
  %870 = vmatpush2.msra.mxu0 0.0
  %871 = vmatprep.subr.mxu0 0.0
  %872 = vmatpush2.msra.mxu0 0.0
  %873 = vmatprep.mubr.f32.mxu0 0.0
  %874 = vmatmul.mubr.f32.gmra.mxu0 %v807
  %v875 = vpop.f32.mrf.mxu0
  %v876 = vadd.f32 0.0, %v875
  %v877 = vpop.f32.mrf.mxu0
  %878 = vdwg.mxu0
  %v879 = vadd.f32 %v803, %v876
  %v880 = vxor.u32 %v879, 2147483648
  %v881 = vmul.f32 %v880, 1.442695
  %v882 = vpow.pop %v881
  %v883 = vadd.f32 %v882, 1.0
  %v884 = vrcp.pop %v883
  %v885 = vmul.f32 1.0, %v884
  %v886 = vtanh.pop %v879
  %v887 = vmul.f32 %v885, %v794
  %889 = vrot.lane.b32.xlu0 %v886, 64
  %v890 = vpop.permute.xlu0 %889
  %v892 = vmul.f32 %v885, %v890
  %894 = vrot.lane.b32.xlu0 %v892, 32
  %v895 = vpop.permute.xlu0 %894
  %v897 = vadd.f32 %v887, %v895
  %v898 = vtanh.pop %v897
  %900 = vrot.lane.b32.xlu0 %v898, 64
  %v901 = vpop.permute.xlu0 %900
  %v903 = vmul.f32 %v885, %v901
  %vm904 = vcmp.gt.s32.totalorder %v43, 5
  %v905 = vsel %vm904, 1, 0
  %906 = vset.pattern.permute.xlu0 0
  %907 = vperm.xlu0 %906, %v905
  %v908 = vpop.permute.xlu0 %907
  %vm909 = vcmp.eq.s32.totalorder %v908, 1
  %v910 = vsel %vm909, %v897, %v794
  %v911 = vsel %vm909, %v903, %v795
  %vm912 = vcmp.eq.f32.partialorder %v903, 0.0
  %v913 = vsel %vm912, -1e+08, %v903
  %v914 = vsel %vm909, %v913, -1e+08
  %v915 = vmax.f32 %v799, %v914
  %s916 = smul.u32 6, 2
  %s917 = smul.addr %s916, 8
  %s918 = scalar_lea.vmem [#allocation2], %s917
  %v919 = vld [vmem:[%s918] sm:$0xff]
  %921 = vrot.lane.b32.xlu0 %v911, 32
  %v922 = vpop.permute.xlu0 %921
  %v923 = vsel %vm64, %v922, 0
  %925 = vmatprep.subr.mxu0 0.0
  %926 = vmatpush1.msra.mxu0 0.0
  %927 = vmatprep.subr.mxu0 0.0
  %928 = vmatpush1.msra.mxu0 0.0
  %929 = vmatprep.subr.mxu0 0.0
  %930 = vmatpush1.msra.mxu0 0.0
  %931 = vmatprep.subr.mxu0 0.0
  %932 = vmatpush1.msra.mxu0 0.0
  %933 = vmatprep.subr.mxu0 0.0
  %934 = vmatpush1.msra.mxu0 0.0
  %935 = vmatprep.subr.mxu0 0.0
  %936 = vmatpush1.msra.mxu0 0.0
  %937 = vmatprep.subr.mxu0 0.0
  %938 = vmatpush1.msra.mxu0 0.0
  %939 = vmatprep.subr.mxu0 0.0
  %940 = vmatpush1.msra.mxu0 0.0
  %941 = vmatprep.subr.mxu0 0.0
  %942 = vmatpush1.msra.mxu0 0.0
  %943 = vmatprep.subr.mxu0 0.0
  %944 = vmatpush1.msra.mxu0 0.0
  %945 = vmatprep.subr.mxu0 0.0
  %946 = vmatpush1.msra.mxu0 0.0
  %947 = vmatprep.subr.mxu0 0.0
  %948 = vmatpush1.msra.mxu0 0.0
  %949 = vmatprep.subr.mxu0 0.0
  %950 = vmatpush1.msra.mxu0 %v221
  %951 = vmatprep.subr.mxu0 0.0
  %952 = vmatpush1.msra.mxu0 %v220
  %953 = vmatprep.subr.mxu0 0.0
  %954 = vmatpush1.msra.mxu0 %v219
  %955 = vmatprep.subr.mxu0 0.0
  %956 = vmatpush1.msra.mxu0 %v218
  %957 = vmatprep.subr.mxu0 0.0
  %958 = vmatpush2.msra.mxu0 0.0
  %959 = vmatprep.subr.mxu0 0.0
  %960 = vmatpush2.msra.mxu0 0.0
  %961 = vmatprep.subr.mxu0 0.0
  %962 = vmatpush2.msra.mxu0 0.0
  %963 = vmatprep.subr.mxu0 0.0
  %964 = vmatpush2.msra.mxu0 0.0
  %965 = vmatprep.subr.mxu0 0.0
  %966 = vmatpush2.msra.mxu0 0.0
  %967 = vmatprep.subr.mxu0 0.0
  %968 = vmatpush2.msra.mxu0 0.0
  %969 = vmatprep.subr.mxu0 0.0
  %970 = vmatpush2.msra.mxu0 0.0
  %971 = vmatprep.subr.mxu0 0.0
  %972 = vmatpush2.msra.mxu0 0.0
  %973 = vmatprep.subr.mxu0 0.0
  %974 = vmatpush2.msra.mxu0 0.0
  %975 = vmatprep.subr.mxu0 0.0
  %976 = vmatpush2.msra.mxu0 0.0
  %977 = vmatprep.subr.mxu0 0.0
  %978 = vmatpush2.msra.mxu0 0.0
  %979 = vmatprep.subr.mxu0 0.0
  %980 = vmatpush2.msra.mxu0 0.0
  %981 = vmatprep.subr.mxu0 0.0
  %982 = vmatpush2.msra.mxu0 0.0
  %983 = vmatprep.subr.mxu0 0.0
  %984 = vmatpush2.msra.mxu0 0.0
  %985 = vmatprep.subr.mxu0 0.0
  %986 = vmatpush2.msra.mxu0 0.0
  %987 = vmatprep.subr.mxu0 0.0
  %988 = vmatpush2.msra.mxu0 0.0
  %989 = vmatprep.mubr.f32.mxu0 0.0
  %990 = vmatmul.mubr.f32.gmra.mxu0 %v923
  %v991 = vpop.f32.mrf.mxu0
  %v992 = vadd.f32 0.0, %v991
  %v993 = vpop.f32.mrf.mxu0
  %994 = vdwg.mxu0
  %v995 = vadd.f32 %v919, %v992
  %v996 = vxor.u32 %v995, 2147483648
  %v997 = vmul.f32 %v996, 1.442695
  %v998 = vpow.pop %v997
  %v999 = vadd.f32 %v998, 1.0
  %v1000 = vrcp.pop %v999
  %v1001 = vmul.f32 1.0, %v1000
  %v1002 = vtanh.pop %v995
  %v1003 = vmul.f32 %v1001, %v910
  %1005 = vrot.lane.b32.xlu0 %v1002, 64
  %v1006 = vpop.permute.xlu0 %1005
  %v1008 = vmul.f32 %v1001, %v1006
  %1010 = vrot.lane.b32.xlu0 %v1008, 32
  %v1011 = vpop.permute.xlu0 %1010
  %v1013 = vadd.f32 %v1003, %v1011
  %v1014 = vtanh.pop %v1013
  %1016 = vrot.lane.b32.xlu0 %v1014, 64
  %v1017 = vpop.permute.xlu0 %1016
  %v1019 = vmul.f32 %v1001, %v1017
  %vm1020 = vcmp.gt.s32.totalorder %v43, 6
  %v1021 = vsel %vm1020, 1, 0
  %1022 = vset.pattern.permute.xlu0 0
  %1023 = vperm.xlu0 %1022, %v1021
  %v1024 = vpop.permute.xlu0 %1023
  %vm1025 = vcmp.eq.s32.totalorder %v1024, 1
  %v1026 = vsel %vm1025, %v1013, %v910
  %v1027 = vsel %vm1025, %v1019, %v911
  %vm1028 = vcmp.eq.f32.partialorder %v1019, 0.0
  %v1029 = vsel %vm1028, -1e+08, %v1019
  %v1030 = vsel %vm1025, %v1029, -1e+08
  %v1031 = vmax.f32 %v915, %v1030
  %s1032 = smul.u32 7, 2
  %s1033 = smul.addr %s1032, 8
  %s1034 = scalar_lea.vmem [#allocation2], %s1033
  %v1035 = vld [vmem:[%s1034] sm:$0xff]
  %1037 = vrot.lane.b32.xlu0 %v1027, 32
  %v1038 = vpop.permute.xlu0 %1037
  %v1039 = vsel %vm64, %v1038, 0
  %1041 = vmatprep.subr.mxu0 0.0
  %1042 = vmatpush1.msra.mxu0 0.0
  %1043 = vmatprep.subr.mxu0 0.0
  %1044 = vmatpush1.msra.mxu0 0.0
  %1045 = vmatprep.subr.mxu0 0.0
  %1046 = vmatpush1.msra.mxu0 0.0
  %1047 = vmatprep.subr.mxu0 0.0
  %1048 = vmatpush1.msra.mxu0 0.0
  %1049 = vmatprep.subr.mxu0 0.0
  %1050 = vmatpush1.msra.mxu0 0.0
  %1051 = vmatprep.subr.mxu0 0.0
  %1052 = vmatpush1.msra.mxu0 0.0
  %1053 = vmatprep.subr.mxu0 0.0
  %1054 = vmatpush1.msra.mxu0 0.0
  %1055 = vmatprep.subr.mxu0 0.0
  %1056 = vmatpush1.msra.mxu0 0.0
  %1057 = vmatprep.subr.mxu0 0.0
  %1058 = vmatpush1.msra.mxu0 0.0
  %1059 = vmatprep.subr.mxu0 0.0
  %1060 = vmatpush1.msra.mxu0 0.0
  %1061 = vmatprep.subr.mxu0 0.0
  %1062 = vmatpush1.msra.mxu0 0.0
  %1063 = vmatprep.subr.mxu0 0.0
  %1064 = vmatpush1.msra.mxu0 0.0
  %1065 = vmatprep.subr.mxu0 0.0
  %1066 = vmatpush1.msra.mxu0 %v221
  %1067 = vmatprep.subr.mxu0 0.0
  %1068 = vmatpush1.msra.mxu0 %v220
  %1069 = vmatprep.subr.mxu0 0.0
  %1070 = vmatpush1.msra.mxu0 %v219
  %1071 = vmatprep.subr.mxu0 0.0
  %1072 = vmatpush1.msra.mxu0 %v218
  %1073 = vmatprep.subr.mxu0 0.0
  %1074 = vmatpush2.msra.mxu0 0.0
  %1075 = vmatprep.subr.mxu0 0.0
  %1076 = vmatpush2.msra.mxu0 0.0
  %1077 = vmatprep.subr.mxu0 0.0
  %1078 = vmatpush2.msra.mxu0 0.0
  %1079 = vmatprep.subr.mxu0 0.0
  %1080 = vmatpush2.msra.mxu0 0.0
  %1081 = vmatprep.subr.mxu0 0.0
  %1082 = vmatpush2.msra.mxu0 0.0
  %1083 = vmatprep.subr.mxu0 0.0
  %1084 = vmatpush2.msra.mxu0 0.0
  %1085 = vmatprep.subr.mxu0 0.0
  %1086 = vmatpush2.msra.mxu0 0.0
  %1087 = vmatprep.subr.mxu0 0.0
  %1088 = vmatpush2.msra.mxu0 0.0
  %1089 = vmatprep.subr.mxu0 0.0
  %1090 = vmatpush2.msra.mxu0 0.0
  %1091 = vmatprep.subr.mxu0 0.0
  %1092 = vmatpush2.msra.mxu0 0.0
  %1093 = vmatprep.subr.mxu0 0.0
  %1094 = vmatpush2.msra.mxu0 0.0
  %1095 = vmatprep.subr.mxu0 0.0
  %1096 = vmatpush2.msra.mxu0 0.0
  %1097 = vmatprep.subr.mxu0 0.0
  %1098 = vmatpush2.msra.mxu0 0.0
  %1099 = vmatprep.subr.mxu0 0.0
  %1100 = vmatpush2.msra.mxu0 0.0
  %1101 = vmatprep.subr.mxu0 0.0
  %1102 = vmatpush2.msra.mxu0 0.0
  %1103 = vmatprep.subr.mxu0 0.0
  %1104 = vmatpush2.msra.mxu0 0.0
  %1105 = vmatprep.mubr.f32.mxu0 0.0
  %1106 = vmatmul.mubr.f32.gmra.mxu0 %v1039
  %v1107 = vpop.f32.mrf.mxu0
  %v1108 = vadd.f32 0.0, %v1107
  %v1109 = vpop.f32.mrf.mxu0
  %1110 = vdwg.mxu0
  %v1111 = vadd.f32 %v1035, %v1108
  %v1112 = vxor.u32 %v1111, 2147483648
  %v1113 = vmul.f32 %v1112, 1.442695
  %v1114 = vpow.pop %v1113
  %v1115 = vadd.f32 %v1114, 1.0
  %v1116 = vrcp.pop %v1115
  %v1117 = vmul.f32 1.0, %v1116
  %v1118 = vtanh.pop %v1111
  %v1119 = vmul.f32 %v1117, %v1026
  %1121 = vrot.lane.b32.xlu0 %v1118, 64
  %v1122 = vpop.permute.xlu0 %1121
  %v1124 = vmul.f32 %v1117, %v1122
  %1126 = vrot.lane.b32.xlu0 %v1124, 32
  %v1127 = vpop.permute.xlu0 %1126
  %v1129 = vadd.f32 %v1119, %v1127
  %v1130 = vtanh.pop %v1129
  %1132 = vrot.lane.b32.xlu0 %v1130, 64
  %v1133 = vpop.permute.xlu0 %1132
  %v1135 = vmul.f32 %v1117, %v1133
  %vm1136 = vcmp.gt.s32.totalorder %v43, 7
  %v1137 = vsel %vm1136, 1, 0
  %1138 = vset.pattern.permute.xlu0 0
  %1139 = vperm.xlu0 %1138, %v1137
  %v1140 = vpop.permute.xlu0 %1139
  %vm1141 = vcmp.eq.s32.totalorder %v1140, 1
  %vm1142 = vcmp.eq.f32.partialorder %v1135, 0.0
  %v1143 = vsel %vm1142, -1e+08, %v1135
  %v1144 = vsel %vm1141, %v1143, -1e+08
  %v1145 = vmax.f32 %v1031, %v1144
  %v1146 = vld [vmem:[%s5] sm:$0xff]
  %v1147 = vld [vmem:[%s5 + $0x8] sm:$0xff]
  %v1148 = vld [vmem:[%s5 + $0x10] sm:$0xff]
  %v1149 = vld [vmem:[%s5 + $0x18] sm:$0xff]
  %v1150 = vld [vmem:[%s1034 + $0x8] sm:$0xff]
  %1151 = vmatprep.subr.mxu0 0.0
  %1152 = vmatpush1.msra.mxu0 0.0
  %1153 = vmatprep.subr.mxu0 0.0
  %1154 = vmatpush1.msra.mxu0 0.0
  %1155 = vmatprep.subr.mxu0 0.0
  %1156 = vmatpush1.msra.mxu0 0.0
  %1157 = vmatprep.subr.mxu0 0.0
  %1158 = vmatpush1.msra.mxu0 0.0
  %1159 = vmatprep.subr.mxu0 0.0
  %1160 = vmatpush1.msra.mxu0 0.0
  %1161 = vmatprep.subr.mxu0 0.0
  %1162 = vmatpush1.msra.mxu0 0.0
  %1163 = vmatprep.subr.mxu0 0.0
  %1164 = vmatpush1.msra.mxu0 0.0
  %1165 = vmatprep.subr.mxu0 0.0
  %1166 = vmatpush1.msra.mxu0 0.0
  %1167 = vmatprep.subr.mxu0 0.0
  %1168 = vmatpush1.msra.mxu0 0.0
  %1169 = vmatprep.subr.mxu0 0.0
  %1170 = vmatpush1.msra.mxu0 0.0
  %1171 = vmatprep.subr.mxu0 0.0
  %1172 = vmatpush1.msra.mxu0 0.0
  %1173 = vmatprep.subr.mxu0 0.0
  %1174 = vmatpush1.msra.mxu0 0.0
  %1175 = vmatprep.subr.mxu0 0.0
  %1176 = vmatpush1.msra.mxu0 %v1149
  %1177 = vmatprep.subr.mxu0 0.0
  %1178 = vmatpush1.msra.mxu0 %v1148
  %1179 = vmatprep.subr.mxu0 0.0
  %1180 = vmatpush1.msra.mxu0 %v1147
  %1181 = vmatprep.subr.mxu0 0.0
  %1182 = vmatpush1.msra.mxu0 %v1146
  %1183 = vmatprep.subr.mxu0 0.0
  %1184 = vmatpush2.msra.mxu0 0.0
  %1185 = vmatprep.subr.mxu0 0.0
  %1186 = vmatpush2.msra.mxu0 0.0
  %1187 = vmatprep.subr.mxu0 0.0
  %1188 = vmatpush2.msra.mxu0 0.0
  %1189 = vmatprep.subr.mxu0 0.0
  %1190 = vmatpush2.msra.mxu0 0.0
  %1191 = vmatprep.subr.mxu0 0.0
  %1192 = vmatpush2.msra.mxu0 0.0
  %1193 = vmatprep.subr.mxu0 0.0
  %1194 = vmatpush2.msra.mxu0 0.0
  %1195 = vmatprep.subr.mxu0 0.0
  %1196 = vmatpush2.msra.mxu0 0.0
  %1197 = vmatprep.subr.mxu0 0.0
  %1198 = vmatpush2.msra.mxu0 0.0
  %1199 = vmatprep.subr.mxu0 0.0
  %1200 = vmatpush2.msra.mxu0 0.0
  %1201 = vmatprep.subr.mxu0 0.0
  %1202 = vmatpush2.msra.mxu0 0.0
  %1203 = vmatprep.subr.mxu0 0.0
  %1204 = vmatpush2.msra.mxu0 0.0
  %1205 = vmatprep.subr.mxu0 0.0
  %1206 = vmatpush2.msra.mxu0 0.0
  %1207 = vmatprep.subr.mxu0 0.0
  %1208 = vmatpush2.msra.mxu0 0.0
  %1209 = vmatprep.subr.mxu0 0.0
  %1210 = vmatpush2.msra.mxu0 0.0
  %1211 = vmatprep.subr.mxu0 0.0
  %1212 = vmatpush2.msra.mxu0 0.0
  %1213 = vmatprep.subr.mxu0 0.0
  %1214 = vmatpush2.msra.mxu0 0.0
  %1215 = vmatprep.mubr.f32.mxu0 0.0
  %1216 = vmatmul.mubr.f32.gmra.mxu0 %v227
  %v1217 = vpop.f32.mrf.mxu0
  %v1218 = vadd.f32 0.0, %v1217
  %v1219 = vpop.f32.mrf.mxu0
  %1220 = vdwg.mxu0
  %v1221 = vadd.f32 %v1150, %v1218
  %v1222 = vxor.u32 %v1221, 2147483648
  %v1223 = vmul.f32 %v1222, 1.442695
  %v1224 = vpow.pop %v1223
  %v1225 = vadd.f32 %v1224, 1.0
  %v1226 = vrcp.pop %v1225
  %v1227 = vmul.f32 1.0, %v1226
  %v1228 = vtanh.pop %v1221
  %v1229 = vmul.f32 %v1227, 0.0
  %1231 = vrot.lane.b32.xlu0 %v1228, 64
  %v1232 = vpop.permute.xlu0 %1231
  %v1234 = vmul.f32 %v1227, %v1232
  %1236 = vrot.lane.b32.xlu0 %v1234, 32
  %v1237 = vpop.permute.xlu0 %1236
  %v1239 = vadd.f32 %v1229, %v1237
  %v1240 = vtanh.pop %v1239
  %1242 = vrot.lane.b32.xlu0 %v1240, 64
  %v1243 = vpop.permute.xlu0 %1242
  %v1245 = vmul.f32 %v1227, %v1243
  %v1246 = vsel %vm1141, %v1239, 0.0
  %v1247 = vsel %vm1141, %v1245, 0.0
  %vm1248 = vcmp.eq.f32.partialorder %v1245, 0.0
  %v1249 = vsel %vm1248, -1e+08, %v1245
  %v1250 = vsel %vm1141, %v1249, -1e+08
  %v1251 = vmax.f32 %v1250, -1e+08
  %v1252 = vld [vmem:[%s918 + $0x8] sm:$0xff]
  %1254 = vrot.lane.b32.xlu0 %v1247, 32
  %v1255 = vpop.permute.xlu0 %1254
  %v1256 = vsel %vm64, %v1255, 0
  %1258 = vmatprep.subr.mxu0 0.0
  %1259 = vmatpush1.msra.mxu0 0.0
  %1260 = vmatprep.subr.mxu0 0.0
  %1261 = vmatpush1.msra.mxu0 0.0
  %1262 = vmatprep.subr.mxu0 0.0
  %1263 = vmatpush1.msra.mxu0 0.0
  %1264 = vmatprep.subr.mxu0 0.0
  %1265 = vmatpush1.msra.mxu0 0.0
  %1266 = vmatprep.subr.mxu0 0.0
  %1267 = vmatpush1.msra.mxu0 0.0
  %1268 = vmatprep.subr.mxu0 0.0
  %1269 = vmatpush1.msra.mxu0 0.0
  %1270 = vmatprep.subr.mxu0 0.0
  %1271 = vmatpush1.msra.mxu0 0.0
  %1272 = vmatprep.subr.mxu0 0.0
  %1273 = vmatpush1.msra.mxu0 0.0
  %1274 = vmatprep.subr.mxu0 0.0
  %1275 = vmatpush1.msra.mxu0 0.0
  %1276 = vmatprep.subr.mxu0 0.0
  %1277 = vmatpush1.msra.mxu0 0.0
  %1278 = vmatprep.subr.mxu0 0.0
  %1279 = vmatpush1.msra.mxu0 0.0
  %1280 = vmatprep.subr.mxu0 0.0
  %1281 = vmatpush1.msra.mxu0 0.0
  %1282 = vmatprep.subr.mxu0 0.0
  %1283 = vmatpush1.msra.mxu0 %v1149
  %1284 = vmatprep.subr.mxu0 0.0
  %1285 = vmatpush1.msra.mxu0 %v1148
  %1286 = vmatprep.subr.mxu0 0.0
  %1287 = vmatpush1.msra.mxu0 %v1147
  %1288 = vmatprep.subr.mxu0 0.0
  %1289 = vmatpush1.msra.mxu0 %v1146
  %1290 = vmatprep.subr.mxu0 0.0
  %1291 = vmatpush2.msra.mxu0 0.0
  %1292 = vmatprep.subr.mxu0 0.0
  %1293 = vmatpush2.msra.mxu0 0.0
  %1294 = vmatprep.subr.mxu0 0.0
  %1295 = vmatpush2.msra.mxu0 0.0
  %1296 = vmatprep.subr.mxu0 0.0
  %1297 = vmatpush2.msra.mxu0 0.0
  %1298 = vmatprep.subr.mxu0 0.0
  %1299 = vmatpush2.msra.mxu0 0.0
  %1300 = vmatprep.subr.mxu0 0.0
  %1301 = vmatpush2.msra.mxu0 0.0
  %1302 = vmatprep.subr.mxu0 0.0
  %1303 = vmatpush2.msra.mxu0 0.0
  %1304 = vmatprep.subr.mxu0 0.0
  %1305 = vmatpush2.msra.mxu0 0.0
  %1306 = vmatprep.subr.mxu0 0.0
  %1307 = vmatpush2.msra.mxu0 0.0
  %1308 = vmatprep.subr.mxu0 0.0
  %1309 = vmatpush2.msra.mxu0 0.0
  %1310 = vmatprep.subr.mxu0 0.0
  %1311 = vmatpush2.msra.mxu0 0.0
  %1312 = vmatprep.subr.mxu0 0.0
  %1313 = vmatpush2.msra.mxu0 0.0
  %1314 = vmatprep.subr.mxu0 0.0
  %1315 = vmatpush2.msra.mxu0 0.0
  %1316 = vmatprep.subr.mxu0 0.0
  %1317 = vmatpush2.msra.mxu0 0.0
  %1318 = vmatprep.subr.mxu0 0.0
  %1319 = vmatpush2.msra.mxu0 0.0
  %1320 = vmatprep.subr.mxu0 0.0
  %1321 = vmatpush2.msra.mxu0 0.0
  %1322 = vmatprep.mubr.f32.mxu0 0.0
  %1323 = vmatmul.mubr.f32.gmra.mxu0 %v1256
  %v1324 = vpop.f32.mrf.mxu0
  %v1325 = vadd.f32 0.0, %v1324
  %v1326 = vpop.f32.mrf.mxu0
  %1327 = vdwg.mxu0
  %v1328 = vadd.f32 %v1252, %v1325
  %v1329 = vxor.u32 %v1328, 2147483648
  %v1330 = vmul.f32 %v1329, 1.442695
  %v1331 = vpow.pop %v1330
  %v1332 = vadd.f32 %v1331, 1.0
  %v1333 = vrcp.pop %v1332
  %v1334 = vmul.f32 1.0, %v1333
  %v1335 = vtanh.pop %v1328
  %v1336 = vmul.f32 %v1334, %v1246
  %1338 = vrot.lane.b32.xlu0 %v1335, 64
  %v1339 = vpop.permute.xlu0 %1338
  %v1341 = vmul.f32 %v1334, %v1339
  %1343 = vrot.lane.b32.xlu0 %v1341, 32
  %v1344 = vpop.permute.xlu0 %1343
  %v1346 = vadd.f32 %v1336, %v1344
  %v1347 = vtanh.pop %v1346
  %1349 = vrot.lane.b32.xlu0 %v1347, 64
  %v1350 = vpop.permute.xlu0 %1349
  %v1352 = vmul.f32 %v1334, %v1350
  %v1353 = vsel %vm1025, %v1346, %v1246
  %v1354 = vsel %vm1025, %v1352, %v1247
  %vm1355 = vcmp.eq.f32.partialorder %v1352, 0.0
  %v1356 = vsel %vm1355, -1e+08, %v1352
  %v1357 = vsel %vm1025, %v1356, -1e+08
  %v1358 = vmax.f32 %v1251, %v1357
  %v1359 = vld [vmem:[%s802 + $0x8] sm:$0xff]
  %1361 = vrot.lane.b32.xlu0 %v1354, 32
  %v1362 = vpop.permute.xlu0 %1361
  %v1363 = vsel %vm64, %v1362, 0
  %1365 = vmatprep.subr.mxu0 0.0
  %1366 = vmatpush1.msra.mxu0 0.0
  %1367 = vmatprep.subr.mxu0 0.0
  %1368 = vmatpush1.msra.mxu0 0.0
  %1369 = vmatprep.subr.mxu0 0.0
  %1370 = vmatpush1.msra.mxu0 0.0
  %1371 = vmatprep.subr.mxu0 0.0
  %1372 = vmatpush1.msra.mxu0 0.0
  %1373 = vmatprep.subr.mxu0 0.0
  %1374 = vmatpush1.msra.mxu0 0.0
  %1375 = vmatprep.subr.mxu0 0.0
  %1376 = vmatpush1.msra.mxu0 0.0
  %1377 = vmatprep.subr.mxu0 0.0
  %1378 = vmatpush1.msra.mxu0 0.0
  %1379 = vmatprep.subr.mxu0 0.0
  %1380 = vmatpush1.msra.mxu0 0.0
  %1381 = vmatprep.subr.mxu0 0.0
  %1382 = vmatpush1.msra.mxu0 0.0
  %1383 = vmatprep.subr.mxu0 0.0
  %1384 = vmatpush1.msra.mxu0 0.0
  %1385 = vmatprep.subr.mxu0 0.0
  %1386 = vmatpush1.msra.mxu0 0.0
  %1387 = vmatprep.subr.mxu0 0.0
  %1388 = vmatpush1.msra.mxu0 0.0
  %1389 = vmatprep.subr.mxu0 0.0
  %1390 = vmatpush1.msra.mxu0 %v1149
  %1391 = vmatprep.subr.mxu0 0.0
  %1392 = vmatpush1.msra.mxu0 %v1148
  %1393 = vmatprep.subr.mxu0 0.0
  %1394 = vmatpush1.msra.mxu0 %v1147
  %1395 = vmatprep.subr.mxu0 0.0
  %1396 = vmatpush1.msra.mxu0 %v1146
  %1397 = vmatprep.subr.mxu0 0.0
  %1398 = vmatpush2.msra.mxu0 0.0
  %1399 = vmatprep.subr.mxu0 0.0
  %1400 = vmatpush2.msra.mxu0 0.0
  %1401 = vmatprep.subr.mxu0 0.0
  %1402 = vmatpush2.msra.mxu0 0.0
  %1403 = vmatprep.subr.mxu0 0.0
  %1404 = vmatpush2.msra.mxu0 0.0
  %1405 = vmatprep.subr.mxu0 0.0
  %1406 = vmatpush2.msra.mxu0 0.0
  %1407 = vmatprep.subr.mxu0 0.0
  %1408 = vmatpush2.msra.mxu0 0.0
  %1409 = vmatprep.subr.mxu0 0.0
  %1410 = vmatpush2.msra.mxu0 0.0
  %1411 = vmatprep.subr.mxu0 0.0
  %1412 = vmatpush2.msra.mxu0 0.0
  %1413 = vmatprep.subr.mxu0 0.0
  %1414 = vmatpush2.msra.mxu0 0.0
  %1415 = vmatprep.subr.mxu0 0.0
  %1416 = vmatpush2.msra.mxu0 0.0
  %1417 = vmatprep.subr.mxu0 0.0
  %1418 = vmatpush2.msra.mxu0 0.0
  %1419 = vmatprep.subr.mxu0 0.0
  %1420 = vmatpush2.msra.mxu0 0.0
  %1421 = vmatprep.subr.mxu0 0.0
  %1422 = vmatpush2.msra.mxu0 0.0
  %1423 = vmatprep.subr.mxu0 0.0
  %1424 = vmatpush2.msra.mxu0 0.0
  %1425 = vmatprep.subr.mxu0 0.0
  %1426 = vmatpush2.msra.mxu0 0.0
  %1427 = vmatprep.subr.mxu0 0.0
  %1428 = vmatpush2.msra.mxu0 0.0
  %1429 = vmatprep.mubr.f32.mxu0 0.0
  %1430 = vmatmul.mubr.f32.gmra.mxu0 %v1363
  %v1431 = vpop.f32.mrf.mxu0
  %v1432 = vadd.f32 0.0, %v1431
  %v1433 = vpop.f32.mrf.mxu0
  %1434 = vdwg.mxu0
  %v1435 = vadd.f32 %v1359, %v1432
  %v1436 = vxor.u32 %v1435, 2147483648
  %v1437 = vmul.f32 %v1436, 1.442695
  %v1438 = vpow.pop %v1437
  %v1439 = vadd.f32 %v1438, 1.0
  %v1440 = vrcp.pop %v1439
  %v1441 = vmul.f32 1.0, %v1440
  %v1442 = vtanh.pop %v1435
  %v1443 = vmul.f32 %v1441, %v1353
  %1445 = vrot.lane.b32.xlu0 %v1442, 64
  %v1446 = vpop.permute.xlu0 %1445
  %v1448 = vmul.f32 %v1441, %v1446
  %1450 = vrot.lane.b32.xlu0 %v1448, 32
  %v1451 = vpop.permute.xlu0 %1450
  %v1453 = vadd.f32 %v1443, %v1451
  %v1454 = vtanh.pop %v1453
  %1456 = vrot.lane.b32.xlu0 %v1454, 64
  %v1457 = vpop.permute.xlu0 %1456
  %v1459 = vmul.f32 %v1441, %v1457
  %v1460 = vsel %vm909, %v1453, %v1353
  %v1461 = vsel %vm909, %v1459, %v1354
  %vm1462 = vcmp.eq.f32.partialorder %v1459, 0.0
  %v1463 = vsel %vm1462, -1e+08, %v1459
  %v1464 = vsel %vm909, %v1463, -1e+08
  %v1465 = vmax.f32 %v1358, %v1464
  %v1466 = vld [vmem:[%s686 + $0x8] sm:$0xff]
  %1468 = vrot.lane.b32.xlu0 %v1461, 32
  %v1469 = vpop.permute.xlu0 %1468
  %v1470 = vsel %vm64, %v1469, 0
  %1472 = vmatprep.subr.mxu0 0.0
  %1473 = vmatpush1.msra.mxu0 0.0
  %1474 = vmatprep.subr.mxu0 0.0
  %1475 = vmatpush1.msra.mxu0 0.0
  %1476 = vmatprep.subr.mxu0 0.0
  %1477 = vmatpush1.msra.mxu0 0.0
  %1478 = vmatprep.subr.mxu0 0.0
  %1479 = vmatpush1.msra.mxu0 0.0
  %1480 = vmatprep.subr.mxu0 0.0
  %1481 = vmatpush1.msra.mxu0 0.0
  %1482 = vmatprep.subr.mxu0 0.0
  %1483 = vmatpush1.msra.mxu0 0.0
  %1484 = vmatprep.subr.mxu0 0.0
  %1485 = vmatpush1.msra.mxu0 0.0
  %1486 = vmatprep.subr.mxu0 0.0
  %1487 = vmatpush1.msra.mxu0 0.0
  %1488 = vmatprep.subr.mxu0 0.0
  %1489 = vmatpush1.msra.mxu0 0.0
  %1490 = vmatprep.subr.mxu0 0.0
  %1491 = vmatpush1.msra.mxu0 0.0
  %1492 = vmatprep.subr.mxu0 0.0
  %1493 = vmatpush1.msra.mxu0 0.0
  %1494 = vmatprep.subr.mxu0 0.0
  %1495 = vmatpush1.msra.mxu0 0.0
  %1496 = vmatprep.subr.mxu0 0.0
  %1497 = vmatpush1.msra.mxu0 %v1149
  %1498 = vmatprep.subr.mxu0 0.0
  %1499 = vmatpush1.msra.mxu0 %v1148
  %1500 = vmatprep.subr.mxu0 0.0
  %1501 = vmatpush1.msra.mxu0 %v1147
  %1502 = vmatprep.subr.mxu0 0.0
  %1503 = vmatpush1.msra.mxu0 %v1146
  %1504 = vmatprep.subr.mxu0 0.0
  %1505 = vmatpush2.msra.mxu0 0.0
  %1506 = vmatprep.subr.mxu0 0.0
  %1507 = vmatpush2.msra.mxu0 0.0
  %1508 = vmatprep.subr.mxu0 0.0
  %1509 = vmatpush2.msra.mxu0 0.0
  %1510 = vmatprep.subr.mxu0 0.0
  %1511 = vmatpush2.msra.mxu0 0.0
  %1512 = vmatprep.subr.mxu0 0.0
  %1513 = vmatpush2.msra.mxu0 0.0
  %1514 = vmatprep.subr.mxu0 0.0
  %1515 = vmatpush2.msra.mxu0 0.0
  %1516 = vmatprep.subr.mxu0 0.0
  %1517 = vmatpush2.msra.mxu0 0.0
  %1518 = vmatprep.subr.mxu0 0.0
  %1519 = vmatpush2.msra.mxu0 0.0
  %1520 = vmatprep.subr.mxu0 0.0
  %1521 = vmatpush2.msra.mxu0 0.0
  %1522 = vmatprep.subr.mxu0 0.0
  %1523 = vmatpush2.msra.mxu0 0.0
  %1524 = vmatprep.subr.mxu0 0.0
  %1525 = vmatpush2.msra.mxu0 0.0
  %1526 = vmatprep.subr.mxu0 0.0
  %1527 = vmatpush2.msra.mxu0 0.0
  %1528 = vmatprep.subr.mxu0 0.0
  %1529 = vmatpush2.msra.mxu0 0.0
  %1530 = vmatprep.subr.mxu0 0.0
  %1531 = vmatpush2.msra.mxu0 0.0
  %1532 = vmatprep.subr.mxu0 0.0
  %1533 = vmatpush2.msra.mxu0 0.0
  %1534 = vmatprep.subr.mxu0 0.0
  %1535 = vmatpush2.msra.mxu0 0.0
  %1536 = vmatprep.mubr.f32.mxu0 0.0
  %1537 = vmatmul.mubr.f32.gmra.mxu0 %v1470
  %v1538 = vpop.f32.mrf.mxu0
  %v1539 = vadd.f32 0.0, %v1538
  %v1540 = vpop.f32.mrf.mxu0
  %1541 = vdwg.mxu0
  %v1542 = vadd.f32 %v1466, %v1539
  %v1543 = vxor.u32 %v1542, 2147483648
  %v1544 = vmul.f32 %v1543, 1.442695
  %v1545 = vpow.pop %v1544
  %v1546 = vadd.f32 %v1545, 1.0
  %v1547 = vrcp.pop %v1546
  %v1548 = vmul.f32 1.0, %v1547
  %v1549 = vtanh.pop %v1542
  %v1550 = vmul.f32 %v1548, %v1460
  %1552 = vrot.lane.b32.xlu0 %v1549, 64
  %v1553 = vpop.permute.xlu0 %1552
  %v1555 = vmul.f32 %v1548, %v1553
  %1557 = vrot.lane.b32.xlu0 %v1555, 32
  %v1558 = vpop.permute.xlu0 %1557
  %v1560 = vadd.f32 %v1550, %v1558
  %v1561 = vtanh.pop %v1560
  %1563 = vrot.lane.b32.xlu0 %v1561, 64
  %v1564 = vpop.permute.xlu0 %1563
  %v1566 = vmul.f32 %v1548, %v1564
  %v1567 = vsel %vm793, %v1560, %v1460
  %v1568 = vsel %vm793, %v1566, %v1461
  %vm1569 = vcmp.eq.f32.partialorder %v1566, 0.0
  %v1570 = vsel %vm1569, -1e+08, %v1566
  %v1571 = vsel %vm793, %v1570, -1e+08
  %v1572 = vmax.f32 %v1465, %v1571
  %v1573 = vld [vmem:[%s570 + $0x8] sm:$0xff]
  %1575 = vrot.lane.b32.xlu0 %v1568, 32
  %v1576 = vpop.permute.xlu0 %1575
  %v1577 = vsel %vm64, %v1576, 0
  %1579 = vmatprep.subr.mxu0 0.0
  %1580 = vmatpush1.msra.mxu0 0.0
  %1581 = vmatprep.subr.mxu0 0.0
  %1582 = vmatpush1.msra.mxu0 0.0
  %1583 = vmatprep.subr.mxu0 0.0
  %1584 = vmatpush1.msra.mxu0 0.0
  %1585 = vmatprep.subr.mxu0 0.0
  %1586 = vmatpush1.msra.mxu0 0.0
  %1587 = vmatprep.subr.mxu0 0.0
  %1588 = vmatpush1.msra.mxu0 0.0
  %1589 = vmatprep.subr.mxu0 0.0
  %1590 = vmatpush1.msra.mxu0 0.0
  %1591 = vmatprep.subr.mxu0 0.0
  %1592 = vmatpush1.msra.mxu0 0.0
  %1593 = vmatprep.subr.mxu0 0.0
  %1594 = vmatpush1.msra.mxu0 0.0
  %1595 = vmatprep.subr.mxu0 0.0
  %1596 = vmatpush1.msra.mxu0 0.0
  %1597 = vmatprep.subr.mxu0 0.0
  %1598 = vmatpush1.msra.mxu0 0.0
  %1599 = vmatprep.subr.mxu0 0.0
  %1600 = vmatpush1.msra.mxu0 0.0
  %1601 = vmatprep.subr.mxu0 0.0
  %1602 = vmatpush1.msra.mxu0 0.0
  %1603 = vmatprep.subr.mxu0 0.0
  %1604 = vmatpush1.msra.mxu0 %v1149
  %1605 = vmatprep.subr.mxu0 0.0
  %1606 = vmatpush1.msra.mxu0 %v1148
  %1607 = vmatprep.subr.mxu0 0.0
  %1608 = vmatpush1.msra.mxu0 %v1147
  %1609 = vmatprep.subr.mxu0 0.0
  %1610 = vmatpush1.msra.mxu0 %v1146
  %1611 = vmatprep.subr.mxu0 0.0
  %1612 = vmatpush2.msra.mxu0 0.0
  %1613 = vmatprep.subr.mxu0 0.0
  %1614 = vmatpush2.msra.mxu0 0.0
  %1615 = vmatprep.subr.mxu0 0.0
  %1616 = vmatpush2.msra.mxu0 0.0
  %1617 = vmatprep.subr.mxu0 0.0
  %1618 = vmatpush2.msra.mxu0 0.0
  %1619 = vmatprep.subr.mxu0 0.0
  %1620 = vmatpush2.msra.mxu0 0.0
  %1621 = vmatprep.subr.mxu0 0.0
  %1622 = vmatpush2.msra.mxu0 0.0
  %1623 = vmatprep.subr.mxu0 0.0
  %1624 = vmatpush2.msra.mxu0 0.0
  %1625 = vmatprep.subr.mxu0 0.0
  %1626 = vmatpush2.msra.mxu0 0.0
  %1627 = vmatprep.subr.mxu0 0.0
  %1628 = vmatpush2.msra.mxu0 0.0
  %1629 = vmatprep.subr.mxu0 0.0
  %1630 = vmatpush2.msra.mxu0 0.0
  %1631 = vmatprep.subr.mxu0 0.0
  %1632 = vmatpush2.msra.mxu0 0.0
  %1633 = vmatprep.subr.mxu0 0.0
  %1634 = vmatpush2.msra.mxu0 0.0
  %1635 = vmatprep.subr.mxu0 0.0
  %1636 = vmatpush2.msra.mxu0 0.0
  %1637 = vmatprep.subr.mxu0 0.0
  %1638 = vmatpush2.msra.mxu0 0.0
  %1639 = vmatprep.subr.mxu0 0.0
  %1640 = vmatpush2.msra.mxu0 0.0
  %1641 = vmatprep.subr.mxu0 0.0
  %1642 = vmatpush2.msra.mxu0 0.0
  %1643 = vmatprep.mubr.f32.mxu0 0.0
  %1644 = vmatmul.mubr.f32.gmra.mxu0 %v1577
  %v1645 = vpop.f32.mrf.mxu0
  %v1646 = vadd.f32 0.0, %v1645
  %v1647 = vpop.f32.mrf.mxu0
  %1648 = vdwg.mxu0
  %v1649 = vadd.f32 %v1573, %v1646
  %v1650 = vxor.u32 %v1649, 2147483648
  %v1651 = vmul.f32 %v1650, 1.442695
  %v1652 = vpow.pop %v1651
  %v1653 = vadd.f32 %v1652, 1.0
  %v1654 = vrcp.pop %v1653
  %v1655 = vmul.f32 1.0, %v1654
  %v1656 = vtanh.pop %v1649
  %v1657 = vmul.f32 %v1655, %v1567
  %1659 = vrot.lane.b32.xlu0 %v1656, 64
  %v1660 = vpop.permute.xlu0 %1659
  %v1662 = vmul.f32 %v1655, %v1660
  %1664 = vrot.lane.b32.xlu0 %v1662, 32
  %v1665 = vpop.permute.xlu0 %1664
  %v1667 = vadd.f32 %v1657, %v1665
  %v1668 = vtanh.pop %v1667
  %1670 = vrot.lane.b32.xlu0 %v1668, 64
  %v1671 = vpop.permute.xlu0 %1670
  %v1673 = vmul.f32 %v1655, %v1671
  %v1674 = vsel %vm677, %v1667, %v1567
  %v1675 = vsel %vm677, %v1673, %v1568
  %vm1676 = vcmp.eq.f32.partialorder %v1673, 0.0
  %v1677 = vsel %vm1676, -1e+08, %v1673
  %v1678 = vsel %vm677, %v1677, -1e+08
  %v1679 = vmax.f32 %v1572, %v1678
  %v1680 = vld [vmem:[%s454 + $0x8] sm:$0xff]
  %1682 = vrot.lane.b32.xlu0 %v1675, 32
  %v1683 = vpop.permute.xlu0 %1682
  %v1684 = vsel %vm64, %v1683, 0
  %1686 = vmatprep.subr.mxu0 0.0
  %1687 = vmatpush1.msra.mxu0 0.0
  %1688 = vmatprep.subr.mxu0 0.0
  %1689 = vmatpush1.msra.mxu0 0.0
  %1690 = vmatprep.subr.mxu0 0.0
  %1691 = vmatpush1.msra.mxu0 0.0
  %1692 = vmatprep.subr.mxu0 0.0
  %1693 = vmatpush1.msra.mxu0 0.0
  %1694 = vmatprep.subr.mxu0 0.0
  %1695 = vmatpush1.msra.mxu0 0.0
  %1696 = vmatprep.subr.mxu0 0.0
  %1697 = vmatpush1.msra.mxu0 0.0
  %1698 = vmatprep.subr.mxu0 0.0
  %1699 = vmatpush1.msra.mxu0 0.0
  %1700 = vmatprep.subr.mxu0 0.0
  %1701 = vmatpush1.msra.mxu0 0.0
  %1702 = vmatprep.subr.mxu0 0.0
  %1703 = vmatpush1.msra.mxu0 0.0
  %1704 = vmatprep.subr.mxu0 0.0
  %1705 = vmatpush1.msra.mxu0 0.0
  %1706 = vmatprep.subr.mxu0 0.0
  %1707 = vmatpush1.msra.mxu0 0.0
  %1708 = vmatprep.subr.mxu0 0.0
  %1709 = vmatpush1.msra.mxu0 0.0
  %1710 = vmatprep.subr.mxu0 0.0
  %1711 = vmatpush1.msra.mxu0 %v1149
  %1712 = vmatprep.subr.mxu0 0.0
  %1713 = vmatpush1.msra.mxu0 %v1148
  %1714 = vmatprep.subr.mxu0 0.0
  %1715 = vmatpush1.msra.mxu0 %v1147
  %1716 = vmatprep.subr.mxu0 0.0
  %1717 = vmatpush1.msra.mxu0 %v1146
  %1718 = vmatprep.subr.mxu0 0.0
  %1719 = vmatpush2.msra.mxu0 0.0
  %1720 = vmatprep.subr.mxu0 0.0
  %1721 = vmatpush2.msra.mxu0 0.0
  %1722 = vmatprep.subr.mxu0 0.0
  %1723 = vmatpush2.msra.mxu0 0.0
  %1724 = vmatprep.subr.mxu0 0.0
  %1725 = vmatpush2.msra.mxu0 0.0
  %1726 = vmatprep.subr.mxu0 0.0
  %1727 = vmatpush2.msra.mxu0 0.0
  %1728 = vmatprep.subr.mxu0 0.0
  %1729 = vmatpush2.msra.mxu0 0.0
  %1730 = vmatprep.subr.mxu0 0.0
  %1731 = vmatpush2.msra.mxu0 0.0
  %1732 = vmatprep.subr.mxu0 0.0
  %1733 = vmatpush2.msra.mxu0 0.0
  %1734 = vmatprep.subr.mxu0 0.0
  %1735 = vmatpush2.msra.mxu0 0.0
  %1736 = vmatprep.subr.mxu0 0.0
  %1737 = vmatpush2.msra.mxu0 0.0
  %1738 = vmatprep.subr.mxu0 0.0
  %1739 = vmatpush2.msra.mxu0 0.0
  %1740 = vmatprep.subr.mxu0 0.0
  %1741 = vmatpush2.msra.mxu0 0.0
  %1742 = vmatprep.subr.mxu0 0.0
  %1743 = vmatpush2.msra.mxu0 0.0
  %1744 = vmatprep.subr.mxu0 0.0
  %1745 = vmatpush2.msra.mxu0 0.0
  %1746 = vmatprep.subr.mxu0 0.0
  %1747 = vmatpush2.msra.mxu0 0.0
  %1748 = vmatprep.subr.mxu0 0.0
  %1749 = vmatpush2.msra.mxu0 0.0
  %1750 = vmatprep.mubr.f32.mxu0 0.0
  %1751 = vmatmul.mubr.f32.gmra.mxu0 %v1684
  %v1752 = vpop.f32.mrf.mxu0
  %v1753 = vadd.f32 0.0, %v1752
  %v1754 = vpop.f32.mrf.mxu0
  %1755 = vdwg.mxu0
  %v1756 = vadd.f32 %v1680, %v1753
  %v1757 = vxor.u32 %v1756, 2147483648
  %v1758 = vmul.f32 %v1757, 1.442695
  %v1759 = vpow.pop %v1758
  %v1760 = vadd.f32 %v1759, 1.0
  %v1761 = vrcp.pop %v1760
  %v1762 = vmul.f32 1.0, %v1761
  %v1763 = vtanh.pop %v1756
  %v1764 = vmul.f32 %v1762, %v1674
  %1766 = vrot.lane.b32.xlu0 %v1763, 64
  %v1767 = vpop.permute.xlu0 %1766
  %v1769 = vmul.f32 %v1762, %v1767
  %1771 = vrot.lane.b32.xlu0 %v1769, 32
  %v1772 = vpop.permute.xlu0 %1771
  %v1774 = vadd.f32 %v1764, %v1772
  %v1775 = vtanh.pop %v1774
  %1777 = vrot.lane.b32.xlu0 %v1775, 64
  %v1778 = vpop.permute.xlu0 %1777
  %v1780 = vmul.f32 %v1762, %v1778
  %v1781 = vsel %vm561, %v1774, %v1674
  %v1782 = vsel %vm561, %v1780, %v1675
  %vm1783 = vcmp.eq.f32.partialorder %v1780, 0.0
  %v1784 = vsel %vm1783, -1e+08, %v1780
  %v1785 = vsel %vm561, %v1784, -1e+08
  %v1786 = vmax.f32 %v1679, %v1785
  %v1787 = vld [vmem:[%s338 + $0x8] sm:$0xff]
  %1789 = vrot.lane.b32.xlu0 %v1782, 32
  %v1790 = vpop.permute.xlu0 %1789
  %v1791 = vsel %vm64, %v1790, 0
  %1793 = vmatprep.subr.mxu0 0.0
  %1794 = vmatpush1.msra.mxu0 0.0
  %1795 = vmatprep.subr.mxu0 0.0
  %1796 = vmatpush1.msra.mxu0 0.0
  %1797 = vmatprep.subr.mxu0 0.0
  %1798 = vmatpush1.msra.mxu0 0.0
  %1799 = vmatprep.subr.mxu0 0.0
  %1800 = vmatpush1.msra.mxu0 0.0
  %1801 = vmatprep.subr.mxu0 0.0
  %1802 = vmatpush1.msra.mxu0 0.0
  %1803 = vmatprep.subr.mxu0 0.0
  %1804 = vmatpush1.msra.mxu0 0.0
  %1805 = vmatprep.subr.mxu0 0.0
  %1806 = vmatpush1.msra.mxu0 0.0
  %1807 = vmatprep.subr.mxu0 0.0
  %1808 = vmatpush1.msra.mxu0 0.0
  %1809 = vmatprep.subr.mxu0 0.0
  %1810 = vmatpush1.msra.mxu0 0.0
  %1811 = vmatprep.subr.mxu0 0.0
  %1812 = vmatpush1.msra.mxu0 0.0
  %1813 = vmatprep.subr.mxu0 0.0
  %1814 = vmatpush1.msra.mxu0 0.0
  %1815 = vmatprep.subr.mxu0 0.0
  %1816 = vmatpush1.msra.mxu0 0.0
  %1817 = vmatprep.subr.mxu0 0.0
  %1818 = vmatpush1.msra.mxu0 %v1149
  %1819 = vmatprep.subr.mxu0 0.0
  %1820 = vmatpush1.msra.mxu0 %v1148
  %1821 = vmatprep.subr.mxu0 0.0
  %1822 = vmatpush1.msra.mxu0 %v1147
  %1823 = vmatprep.subr.mxu0 0.0
  %1824 = vmatpush1.msra.mxu0 %v1146
  %1825 = vmatprep.subr.mxu0 0.0
  %1826 = vmatpush2.msra.mxu0 0.0
  %1827 = vmatprep.subr.mxu0 0.0
  %1828 = vmatpush2.msra.mxu0 0.0
  %1829 = vmatprep.subr.mxu0 0.0
  %1830 = vmatpush2.msra.mxu0 0.0
  %1831 = vmatprep.subr.mxu0 0.0
  %1832 = vmatpush2.msra.mxu0 0.0
  %1833 = vmatprep.subr.mxu0 0.0
  %1834 = vmatpush2.msra.mxu0 0.0
  %1835 = vmatprep.subr.mxu0 0.0
  %1836 = vmatpush2.msra.mxu0 0.0
  %1837 = vmatprep.subr.mxu0 0.0
  %1838 = vmatpush2.msra.mxu0 0.0
  %1839 = vmatprep.subr.mxu0 0.0
  %1840 = vmatpush2.msra.mxu0 0.0
  %1841 = vmatprep.subr.mxu0 0.0
  %1842 = vmatpush2.msra.mxu0 0.0
  %1843 = vmatprep.subr.mxu0 0.0
  %1844 = vmatpush2.msra.mxu0 0.0
  %1845 = vmatprep.subr.mxu0 0.0
  %1846 = vmatpush2.msra.mxu0 0.0
  %1847 = vmatprep.subr.mxu0 0.0
  %1848 = vmatpush2.msra.mxu0 0.0
  %1849 = vmatprep.subr.mxu0 0.0
  %1850 = vmatpush2.msra.mxu0 0.0
  %1851 = vmatprep.subr.mxu0 0.0
  %1852 = vmatpush2.msra.mxu0 0.0
  %1853 = vmatprep.subr.mxu0 0.0
  %1854 = vmatpush2.msra.mxu0 0.0
  %1855 = vmatprep.subr.mxu0 0.0
  %1856 = vmatpush2.msra.mxu0 0.0
  %1857 = vmatprep.mubr.f32.mxu0 0.0
  %1858 = vmatmul.mubr.f32.gmra.mxu0 %v1791
  %v1859 = vpop.f32.mrf.mxu0
  %v1860 = vadd.f32 0.0, %v1859
  %v1861 = vpop.f32.mrf.mxu0
  %1862 = vdwg.mxu0
  %v1863 = vadd.f32 %v1787, %v1860
  %v1864 = vxor.u32 %v1863, 2147483648
  %v1865 = vmul.f32 %v1864, 1.442695
  %v1866 = vpow.pop %v1865
  %v1867 = vadd.f32 %v1866, 1.0
  %v1868 = vrcp.pop %v1867
  %v1869 = vmul.f32 1.0, %v1868
  %v1870 = vtanh.pop %v1863
  %v1871 = vmul.f32 %v1869, %v1781
  %1873 = vrot.lane.b32.xlu0 %v1870, 64
  %v1874 = vpop.permute.xlu0 %1873
  %v1876 = vmul.f32 %v1869, %v1874
  %1878 = vrot.lane.b32.xlu0 %v1876, 32
  %v1879 = vpop.permute.xlu0 %1878
  %v1881 = vadd.f32 %v1871, %v1879
  %v1882 = vtanh.pop %v1881
  %1884 = vrot.lane.b32.xlu0 %v1882, 64
  %v1885 = vpop.permute.xlu0 %1884
  %v1887 = vmul.f32 %v1869, %v1885
  %v1888 = vsel %vm445, %v1881, %v1781
  %v1889 = vsel %vm445, %v1887, %v1782
  %vm1890 = vcmp.eq.f32.partialorder %v1887, 0.0
  %v1891 = vsel %vm1890, -1e+08, %v1887
  %v1892 = vsel %vm445, %v1891, -1e+08
  %v1893 = vmax.f32 %v1786, %v1892
  %v1894 = vld [vmem:[%s224 + $0x8] sm:$0xff]
  %1896 = vrot.lane.b32.xlu0 %v1889, 32
  %v1897 = vpop.permute.xlu0 %1896
  %v1898 = vsel %vm64, %v1897, 0
  %1900 = vmatprep.subr.mxu0 0.0
  %1901 = vmatpush1.msra.mxu0 0.0
  %1902 = vmatprep.subr.mxu0 0.0
  %1903 = vmatpush1.msra.mxu0 0.0
  %1904 = vmatprep.subr.mxu0 0.0
  %1905 = vmatpush1.msra.mxu0 0.0
  %1906 = vmatprep.subr.mxu0 0.0
  %1907 = vmatpush1.msra.mxu0 0.0
  %1908 = vmatprep.subr.mxu0 0.0
  %1909 = vmatpush1.msra.mxu0 0.0
  %1910 = vmatprep.subr.mxu0 0.0
  %1911 = vmatpush1.msra.mxu0 0.0
  %1912 = vmatprep.subr.mxu0 0.0
  %1913 = vmatpush1.msra.mxu0 0.0
  %1914 = vmatprep.subr.mxu0 0.0
  %1915 = vmatpush1.msra.mxu0 0.0
  %1916 = vmatprep.subr.mxu0 0.0
  %1917 = vmatpush1.msra.mxu0 0.0
  %1918 = vmatprep.subr.mxu0 0.0
  %1919 = vmatpush1.msra.mxu0 0.0
  %1920 = vmatprep.subr.mxu0 0.0
  %1921 = vmatpush1.msra.mxu0 0.0
  %1922 = vmatprep.subr.mxu0 0.0
  %1923 = vmatpush1.msra.mxu0 0.0
  %1924 = vmatprep.subr.mxu0 0.0
  %1925 = vmatpush1.msra.mxu0 %v1149
  %1926 = vmatprep.subr.mxu0 0.0
  %1927 = vmatpush1.msra.mxu0 %v1148
  %1928 = vmatprep.subr.mxu0 0.0
  %1929 = vmatpush1.msra.mxu0 %v1147
  %1930 = vmatprep.subr.mxu0 0.0
  %1931 = vmatpush1.msra.mxu0 %v1146
  %1932 = vmatprep.subr.mxu0 0.0
  %1933 = vmatpush2.msra.mxu0 0.0
  %1934 = vmatprep.subr.mxu0 0.0
  %1935 = vmatpush2.msra.mxu0 0.0
  %1936 = vmatprep.subr.mxu0 0.0
  %1937 = vmatpush2.msra.mxu0 0.0
  %1938 = vmatprep.subr.mxu0 0.0
  %1939 = vmatpush2.msra.mxu0 0.0
  %1940 = vmatprep.subr.mxu0 0.0
  %1941 = vmatpush2.msra.mxu0 0.0
  %1942 = vmatprep.subr.mxu0 0.0
  %1943 = vmatpush2.msra.mxu0 0.0
  %1944 = vmatprep.subr.mxu0 0.0
  %1945 = vmatpush2.msra.mxu0 0.0
  %1946 = vmatprep.subr.mxu0 0.0
  %1947 = vmatpush2.msra.mxu0 0.0
  %1948 = vmatprep.subr.mxu0 0.0
  %1949 = vmatpush2.msra.mxu0 0.0
  %1950 = vmatprep.subr.mxu0 0.0
  %1951 = vmatpush2.msra.mxu0 0.0
  %1952 = vmatprep.subr.mxu0 0.0
  %1953 = vmatpush2.msra.mxu0 0.0
  %1954 = vmatprep.subr.mxu0 0.0
  %1955 = vmatpush2.msra.mxu0 0.0
  %1956 = vmatprep.subr.mxu0 0.0
  %1957 = vmatpush2.msra.mxu0 0.0
  %1958 = vmatprep.subr.mxu0 0.0
  %1959 = vmatpush2.msra.mxu0 0.0
  %1960 = vmatprep.subr.mxu0 0.0
  %1961 = vmatpush2.msra.mxu0 0.0
  %1962 = vmatprep.subr.mxu0 0.0
  %1963 = vmatpush2.msra.mxu0 0.0
  %1964 = vmatprep.mubr.f32.mxu0 0.0
  %1965 = vmatmul.mubr.f32.gmra.mxu0 %v1898
  %v1966 = vpop.f32.mrf.mxu0
  %v1967 = vadd.f32 0.0, %v1966
  %v1968 = vpop.f32.mrf.mxu0
  %1969 = vdwg.mxu0
  %v1970 = vadd.f32 %v1894, %v1967
  %v1971 = vxor.u32 %v1970, 2147483648
  %v1972 = vmul.f32 %v1971, 1.442695
  %v1973 = vpow.pop %v1972
  %v1974 = vadd.f32 %v1973, 1.0
  %v1975 = vrcp.pop %v1974
  %v1976 = vmul.f32 1.0, %v1975
  %v1977 = vtanh.pop %v1970
  %v1978 = vmul.f32 %v1976, %v1888
  %1980 = vrot.lane.b32.xlu0 %v1977, 64
  %v1981 = vpop.permute.xlu0 %1980
  %v1983 = vmul.f32 %v1976, %v1981
  %1985 = vrot.lane.b32.xlu0 %v1983, 32
  %v1986 = vpop.permute.xlu0 %1985
  %v1988 = vadd.f32 %v1978, %v1986
  %v1989 = vtanh.pop %v1988
  %1991 = vrot.lane.b32.xlu0 %v1989, 64
  %v1992 = vpop.permute.xlu0 %1991
  %v1994 = vmul.f32 %v1976, %v1992
  %vm1995 = vcmp.eq.f32.partialorder %v1994, 0.0
  %v1996 = vsel %vm1995, -1e+08, %v1994
  %v1997 = vsel %vm329, %v1996, -1e+08
  %v1998 = vmax.f32 %v1893, %v1997
  %v1999 = vld [vmem:[%s6] sm:$0xff]
  %v2000 = vld [vmem:[%s6 + $0x8] sm:$0xff]
  %v2001 = vld [vmem:[%s6 + $0x10] sm:$0xff]
  %v2002 = vld [vmem:[%s6 + $0x18] sm:$0xff]
  %v2003 = vld [vmem:[%s6 + $0x20] sm:$0xff]
  %v2004 = vld [vmem:[%s6 + $0x28] sm:$0xff]
  %v2005 = vld [vmem:[%s6 + $0x30] sm:$0xff]
  %v2006 = vld [vmem:[%s6 + $0x38] sm:$0xff]
  %2008 = vrot.lane.b32.xlu0 %v1998, 32
  %v2009 = vpop.permute.xlu0 %2008
  %v2010 = vsel %vm64, %v2009, 0
  %2012 = vmatprep.subr.mxu0 0.0
  %2013 = vmatpush1.msra.mxu0 0.0
  %2014 = vmatprep.subr.mxu0 0.0
  %2015 = vmatpush1.msra.mxu0 0.0
  %2016 = vmatprep.subr.mxu0 0.0
  %2017 = vmatpush1.msra.mxu0 0.0
  %2018 = vmatprep.subr.mxu0 0.0
  %2019 = vmatpush1.msra.mxu0 0.0
  %2020 = vmatprep.subr.mxu0 0.0
  %2021 = vmatpush1.msra.mxu0 0.0
  %2022 = vmatprep.subr.mxu0 0.0
  %2023 = vmatpush1.msra.mxu0 0.0
  %2024 = vmatprep.subr.mxu0 0.0
  %2025 = vmatpush1.msra.mxu0 0.0
  %2026 = vmatprep.subr.mxu0 0.0
  %2027 = vmatpush1.msra.mxu0 0.0
  %2028 = vmatprep.subr.mxu0 0.0
  %2029 = vmatpush1.msra.mxu0 0.0
  %2030 = vmatprep.subr.mxu0 0.0
  %2031 = vmatpush1.msra.mxu0 0.0
  %2032 = vmatprep.subr.mxu0 0.0
  %2033 = vmatpush1.msra.mxu0 0.0
  %2034 = vmatprep.subr.mxu0 0.0
  %2035 = vmatpush1.msra.mxu0 0.0
  %2036 = vmatprep.subr.mxu0 0.0
  %2037 = vmatpush1.msra.mxu0 %v2006
  %2038 = vmatprep.subr.mxu0 0.0
  %2039 = vmatpush1.msra.mxu0 %v2005
  %2040 = vmatprep.subr.mxu0 0.0
  %2041 = vmatpush1.msra.mxu0 %v2004
  %2042 = vmatprep.subr.mxu0 0.0
  %2043 = vmatpush1.msra.mxu0 %v2003
  %2044 = vmatprep.subr.mxu0 0.0
  %2045 = vmatpush2.msra.mxu0 0.0
  %2046 = vmatprep.subr.mxu0 0.0
  %2047 = vmatpush2.msra.mxu0 0.0
  %2048 = vmatprep.subr.mxu0 0.0
  %2049 = vmatpush2.msra.mxu0 0.0
  %2050 = vmatprep.subr.mxu0 0.0
  %2051 = vmatpush2.msra.mxu0 0.0
  %2052 = vmatprep.subr.mxu0 0.0
  %2053 = vmatpush2.msra.mxu0 0.0
  %2054 = vmatprep.subr.mxu0 0.0
  %2055 = vmatpush2.msra.mxu0 0.0
  %2056 = vmatprep.subr.mxu0 0.0
  %2057 = vmatpush2.msra.mxu0 0.0
  %2058 = vmatprep.subr.mxu0 0.0
  %2059 = vmatpush2.msra.mxu0 0.0
  %2060 = vmatprep.subr.mxu0 0.0
  %2061 = vmatpush2.msra.mxu0 0.0
  %2062 = vmatprep.subr.mxu0 0.0
  %2063 = vmatpush2.msra.mxu0 0.0
  %2064 = vmatprep.subr.mxu0 0.0
  %2065 = vmatpush2.msra.mxu0 0.0
  %2066 = vmatprep.subr.mxu0 0.0
  %2067 = vmatpush2.msra.mxu0 0.0
  %2068 = vmatprep.subr.mxu0 0.0
  %2069 = vmatpush2.msra.mxu0 0.0
  %2070 = vmatprep.subr.mxu0 0.0
  %2071 = vmatpush2.msra.mxu0 0.0
  %2072 = vmatprep.subr.mxu0 0.0
  %2073 = vmatpush2.msra.mxu0 0.0
  %2074 = vmatprep.subr.mxu0 0.0
  %2075 = vmatpush2.msra.mxu0 0.0
  %2076 = vmatprep.mubr.f32.mxu0 0.0
  %2077 = vmatmul.mubr.f32.gmra.mxu0 %v2010
  %v2078 = vpop.f32.mrf.mxu0
  %v2079 = vadd.f32 0.0, %v2078
  %v2080 = vpop.f32.mrf.mxu0
  %2081 = vdwg.mxu0
  %2083 = vrot.lane.b32.xlu0 %v1145, 32
  %v2084 = vpop.permute.xlu0 %2083
  %v2085 = vsel %vm64, %v2084, 0
  %2087 = vmatprep.subr.mxu0 0.0
  %2088 = vmatpush1.msra.mxu0 0.0
  %2089 = vmatprep.subr.mxu0 0.0
  %2090 = vmatpush1.msra.mxu0 0.0
  %2091 = vmatprep.subr.mxu0 0.0
  %2092 = vmatpush1.msra.mxu0 0.0
  %2093 = vmatprep.subr.mxu0 0.0
  %2094 = vmatpush1.msra.mxu0 0.0
  %2095 = vmatprep.subr.mxu0 0.0
  %2096 = vmatpush1.msra.mxu0 0.0
  %2097 = vmatprep.subr.mxu0 0.0
  %2098 = vmatpush1.msra.mxu0 0.0
  %2099 = vmatprep.subr.mxu0 0.0
  %2100 = vmatpush1.msra.mxu0 0.0
  %2101 = vmatprep.subr.mxu0 0.0
  %2102 = vmatpush1.msra.mxu0 0.0
  %2103 = vmatprep.subr.mxu0 0.0
  %2104 = vmatpush1.msra.mxu0 0.0
  %2105 = vmatprep.subr.mxu0 0.0
  %2106 = vmatpush1.msra.mxu0 0.0
  %2107 = vmatprep.subr.mxu0 0.0
  %2108 = vmatpush1.msra.mxu0 0.0
  %2109 = vmatprep.subr.mxu0 0.0
  %2110 = vmatpush1.msra.mxu0 0.0
  %2111 = vmatprep.subr.mxu0 0.0
  %2112 = vmatpush1.msra.mxu0 %v2002
  %2113 = vmatprep.subr.mxu0 0.0
  %2114 = vmatpush1.msra.mxu0 %v2001
  %2115 = vmatprep.subr.mxu0 0.0
  %2116 = vmatpush1.msra.mxu0 %v2000
  %2117 = vmatprep.subr.mxu0 0.0
  %2118 = vmatpush1.msra.mxu0 %v1999
  %2119 = vmatprep.subr.mxu0 0.0
  %2120 = vmatpush2.msra.mxu0 0.0
  %2121 = vmatprep.subr.mxu0 0.0
  %2122 = vmatpush2.msra.mxu0 0.0
  %2123 = vmatprep.subr.mxu0 0.0
  %2124 = vmatpush2.msra.mxu0 0.0
  %2125 = vmatprep.subr.mxu0 0.0
  %2126 = vmatpush2.msra.mxu0 0.0
  %2127 = vmatprep.subr.mxu0 0.0
  %2128 = vmatpush2.msra.mxu0 0.0
  %2129 = vmatprep.subr.mxu0 0.0
  %2130 = vmatpush2.msra.mxu0 0.0
  %2131 = vmatprep.subr.mxu0 0.0
  %2132 = vmatpush2.msra.mxu0 0.0
  %2133 = vmatprep.subr.mxu0 0.0
  %2134 = vmatpush2.msra.mxu0 0.0
  %2135 = vmatprep.subr.mxu0 0.0
  %2136 = vmatpush2.msra.mxu0 0.0
  %2137 = vmatprep.subr.mxu0 0.0
  %2138 = vmatpush2.msra.mxu0 0.0
  %2139 = vmatprep.subr.mxu0 0.0
  %2140 = vmatpush2.msra.mxu0 0.0
  %2141 = vmatprep.subr.mxu0 0.0
  %2142 = vmatpush2.msra.mxu0 0.0
  %2143 = vmatprep.subr.mxu0 0.0
  %2144 = vmatpush2.msra.mxu0 0.0
  %2145 = vmatprep.subr.mxu0 0.0
  %2146 = vmatpush2.msra.mxu0 0.0
  %2147 = vmatprep.subr.mxu0 0.0
  %2148 = vmatpush2.msra.mxu0 0.0
  %2149 = vmatprep.subr.mxu0 0.0
  %2150 = vmatpush2.msra.mxu0 0.0
  %2151 = vmatprep.mubr.f32.mxu0 0.0
  %2152 = vmatmul.mubr.f32.gmra.mxu0 %v2085
  %v2153 = vpop.f32.mrf.mxu0
  %v2154 = vadd.f32 %v2079, %v2153
  %v2155 = vpop.f32.mrf.mxu0
  %2156 = vdwg.mxu0
  %v2157 = vld [vmem:[%s7] sm:$0x1]
  %v2159 = vlaneseq
  %v2160 = vshrl.u32 %v2159, 7
  %v2161 = vsub.s32 0, %v2160
  %v2162 = vrot.slane %v2157, %v2161
  %v2164 = vadd.f32 %v2154, %v2162
  %v2165 = vmax.f32 %v2164, 0.0
  %v2166 = vld [vmem:[%s8] sm:$0xff]
  %v2167 = vld [vmem:[%s8 + $0x8] sm:$0xff]
  %v2168 = vld [vmem:[%s8 + $0x10] sm:$0xff]
  %v2169 = vld [vmem:[%s8 + $0x18] sm:$0xff]
  %v2170 = vld [vmem:[%s8 + $0x20] sm:$0xff]
  %v2171 = vld [vmem:[%s8 + $0x28] sm:$0xff]
  %v2172 = vld [vmem:[%s8 + $0x30] sm:$0xff]
  %v2173 = vld [vmem:[%s8 + $0x38] sm:$0xff]
  %v2174 = vld [vmem:[%s9] sm:$0x1]
  %v2176 = vlaneseq
  %v2177 = vshrl.u32 %v2176, 7
  %v2178 = vsub.s32 0, %v2177
  %v2179 = vrot.slane %v2174, %v2178
  %vm2181 = vcmask 523264
  %v2183 = vsel %vm2181, %v2165, 0
  %2185 = vmatprep.subr.mxu0 0.0
  %2186 = vmatpush1.msra.mxu0 0.0
  %2187 = vmatprep.subr.mxu0 0.0
  %2188 = vmatpush1.msra.mxu0 0.0
  %2189 = vmatprep.subr.mxu0 0.0
  %2190 = vmatpush1.msra.mxu0 0.0
  %2191 = vmatprep.subr.mxu0 0.0
  %2192 = vmatpush1.msra.mxu0 0.0
  %2193 = vmatprep.subr.mxu0 0.0
  %2194 = vmatpush1.msra.mxu0 0.0
  %2195 = vmatprep.subr.mxu0 0.0
  %2196 = vmatpush1.msra.mxu0 0.0
  %2197 = vmatprep.subr.mxu0 0.0
  %2198 = vmatpush1.msra.mxu0 0.0
  %2199 = vmatprep.subr.mxu0 0.0
  %2200 = vmatpush1.msra.mxu0 0.0
  %2201 = vmatprep.subr.mxu0 0.0
  %2202 = vmatpush1.msra.mxu0 %v2173
  %2203 = vmatprep.subr.mxu0 0.0
  %2204 = vmatpush1.msra.mxu0 %v2172
  %2205 = vmatprep.subr.mxu0 0.0
  %2206 = vmatpush1.msra.mxu0 %v2171
  %2207 = vmatprep.subr.mxu0 0.0
  %2208 = vmatpush1.msra.mxu0 %v2170
  %2209 = vmatprep.subr.mxu0 0.0
  %2210 = vmatpush1.msra.mxu0 %v2169
  %2211 = vmatprep.subr.mxu0 0.0
  %2212 = vmatpush1.msra.mxu0 %v2168
  %2213 = vmatprep.subr.mxu0 0.0
  %2214 = vmatpush1.msra.mxu0 %v2167
  %2215 = vmatprep.subr.mxu0 0.0
  %2216 = vmatpush1.msra.mxu0 %v2166
  %2217 = vmatprep.subr.mxu0 0.0
  %2218 = vmatpush2.msra.mxu0 0.0
  %2219 = vmatprep.subr.mxu0 0.0
  %2220 = vmatpush2.msra.mxu0 0.0
  %2221 = vmatprep.subr.mxu0 0.0
  %2222 = vmatpush2.msra.mxu0 0.0
  %2223 = vmatprep.subr.mxu0 0.0
  %2224 = vmatpush2.msra.mxu0 0.0
  %2225 = vmatprep.subr.mxu0 0.0
  %2226 = vmatpush2.msra.mxu0 0.0
  %2227 = vmatprep.subr.mxu0 0.0
  %2228 = vmatpush2.msra.mxu0 0.0
  %2229 = vmatprep.subr.mxu0 0.0
  %2230 = vmatpush2.msra.mxu0 0.0
  %2231 = vmatprep.subr.mxu0 0.0
  %2232 = vmatpush2.msra.mxu0 0.0
  %2233 = vmatprep.subr.mxu0 0.0
  %2234 = vmatpush2.msra.mxu0 0.0
  %2235 = vmatprep.subr.mxu0 0.0
  %2236 = vmatpush2.msra.mxu0 0.0
  %2237 = vmatprep.subr.mxu0 0.0
  %2238 = vmatpush2.msra.mxu0 0.0
  %2239 = vmatprep.subr.mxu0 0.0
  %2240 = vmatpush2.msra.mxu0 0.0
  %2241 = vmatprep.subr.mxu0 0.0
  %2242 = vmatpush2.msra.mxu0 0.0
  %2243 = vmatprep.subr.mxu0 0.0
  %2244 = vmatpush2.msra.mxu0 0.0
  %2245 = vmatprep.subr.mxu0 0.0
  %2246 = vmatpush2.msra.mxu0 0.0
  %2247 = vmatprep.subr.mxu0 0.0
  %2248 = vmatpush2.msra.mxu0 0.0
  %2249 = vmatprep.mubr.f32.mxu0 0.0
  %2250 = vmatmul.mubr.f32.gmra.mxu0 %v2183
  %v2251 = vpop.f32.mrf.mxu0
  %v2252 = vadd.f32 %v2179, %v2251
  %v2253 = vpop.f32.mrf.mxu0
  %2254 = vdwg.mxu0
  %vm2255 = vcmask 31744
  %2256 = vst.msk [vmem:[%s10] sm:$0xff] %vm2255, %v2252
  // Predicated region
  $region42: #{bilstm_reg_forward.1} parent=0 // pred_check
    _
  $region43: #{bilstm_reg_forward.1} parent=0 // pred_check_branch
    %2258 = sbr.rel (0) target = $region45
  $region44: #{bilstm_reg_forward.1} parent=0 // pred_region
    _
  $region45: #{bilstm_reg_forward.1} parent=0 // pred_fallthru
    _
  // Predicated region
  $region46: #{bilstm_reg_forward.1} parent=0 // pred_check
    _
  $region47: #{bilstm_reg_forward.1} parent=0 // pred_check_branch
    %2260 = sbr.rel (0) target = $region49
  $region48: #{bilstm_reg_forward.1} parent=0 // pred_region
    _
  $region49: #{bilstm_reg_forward.1} parent=0 // pred_fallthru
    _

</llo_original>
